<compile_context>
chip_gen: v7x
topology: tpu7x:2x2x1
jax: 0.10.0
libtpu: 0.0.40
codegen_flags: <defaults>
</compile_context>

<pallas_src>
import functools

import jax
import jax.numpy as jnp
import numpy as np
from jax.experimental import pallas as pl
from jax.experimental.pallas import tpu as pltpu


def _posenc_kernel(x_ref, o_ref, *, freqs, d_input):
    # x_ref: (d_input, tile) lane-dense; o_ref: (d_output, tile).
    x = x_ref[...]
    # Identity piece first, matching [x, sin(f0 x), cos(f0 x), sin(f1 x), ...].
    o_ref[0:d_input, :] = x
    for p, f in enumerate(freqs):  # freqs are compile-time Python floats -> unrolled
        xf = x * f
        base = (1 + 2 * p) * d_input
        o_ref[base:base + d_input, :] = jnp.sin(xf)
        o_ref[base + d_input:base + 2 * d_input, :] = jnp.cos(xf)
        # TODO(synk): optional double-angle recurrence for log_space=True would
        # trade 2*n_freqs EUP ops for 2, but changes numerics; kept exact here.


def positional_encoder(x, *, n_freqs, log_space=False, tile=8192):
    """x: (..., d_input) float -> (..., d_input*(1+2*n_freqs)), same dtype."""
    orig_shape = x.shape
    d_input = orig_shape[-1]
    n = int(np.prod(orig_shape[:-1])) if len(orig_shape) > 1 else 1
    d_output = d_input * (1 + 2 * n_freqs)

    if log_space:
        freq_bands = 2.0 ** np.linspace(0.0, n_freqs - 1, n_freqs)
    else:
        freq_bands = np.linspace(2.0 ** 0.0, 2.0 ** (n_freqs - 1), n_freqs)
    freqs = tuple(float(f) for f in freq_bands)

    # Lane-dense layout: points live on the lane (last) axis.
    xt = x.reshape(n, d_input).T  # (d_input, n)

    # Lane tile: multiple of 128, capped at `tile`; pad n up to a tile multiple.
    n_128 = ((n + 127) // 128) * 128
    tile = min(tile, n_128)
    n_pad = ((n_128 + tile - 1) // tile) * tile
    if n_pad != n:
        xt = jnp.pad(xt, ((0, 0), (0, n_pad - n)))

    grid = (n_pad // tile,)
    kernel = functools.partial(_posenc_kernel, freqs=freqs, d_input=d_input)

    out_t = pl.pallas_call(
        kernel,
        out_shape=jax.ShapeDtypeStruct((d_output, n_pad), x.dtype),
        grid_spec=pl.GridSpec(
            grid=grid,
            # block last dim = tile (multiple of 128); second-last dim equals
            # the full array extent (d_input / d_output), satisfying tiling rules.
            in_specs=[pl.BlockSpec((d_input, tile), lambda i: (0, i))],
            out_specs=pl.BlockSpec((d_output, tile), lambda i: (0, i)),
        ),
        compiler_params=pltpu.CompilerParams(
            dimension_semantics=("parallel",)),
    )(xt)

    out = out_t[:, :n].T  # back to (n, d_output)
    return out.reshape(*orig_shape[:-1], d_output)


def positional_encoder_ref(x, *, n_freqs, log_space=False):
    """Pure-JAX reference mirroring the PyTorch module."""
    if log_space:
        freq_bands = 2.0 ** jnp.linspace(0.0, n_freqs - 1, n_freqs)
    else:
        freq_bands = jnp.linspace(2.0 ** 0.0, 2.0 ** (n_freqs - 1), n_freqs)
    pieces = [x]
    for f in freq_bands:
        pieces.append(jnp.sin(x * f))
        pieces.append(jnp.cos(x * f))
    return jnp.concatenate(pieces, axis=-1)


if __name__ == "__main__":
    # NeRF-style setup: 3-D points, 10 frequencies -> d_output = 63.
    d_input = 3
    n_freqs = 10
    N = 256  # number of points (small test shape)

    key = jax.random.PRNGKey(0)
    x = jax.random.uniform(key, (N, d_input), dtype=jnp.float32,
                           minval=-1.0, maxval=1.0)

    out = positional_encoder(x, n_freqs=n_freqs, log_space=False)
    out = jax.block_until_ready(out)

    ref = positional_encoder_ref(x, n_freqs=n_freqs, log_space=False)
    assert out.shape == (N, d_input * (1 + 2 * n_freqs))
    np.testing.assert_allclose(np.asarray(out), np.asarray(ref),
                               rtol=1e-5, atol=1e-5)

    # Also exercise log_space=True and a larger, non-tile-aligned batch.
    N2 = 1000
    x2 = jax.random.uniform(jax.random.PRNGKey(1), (N2, d_input),
                            dtype=jnp.float32, minval=-1.0, maxval=1.0)
    out2 = jax.block_until_ready(
        positional_encoder(x2, n_freqs=n_freqs, log_space=True))
    ref2 = positional_encoder_ref(x2, n_freqs=n_freqs, log_space=True)
    np.testing.assert_allclose(np.asarray(out2), np.asarray(ref2),
                               rtol=1e-5, atol=1e-5)

    print("KERNEL_OK")
</pallas_src>

<mosaic_0001>
module attributes {stable_mosaic.version = 11 : i64} {
  func.func @_posenc_kernel(%arg0: i32, %arg1: memref<3x256xf32, #tpu.memory_space<vmem>>, %arg2: memref<63x256xf32, #tpu.memory_space<vmem>>) attributes {dimension_semantics = [#tpu.dimension_semantics<parallel>], iteration_bounds = array<i64: 1>, scalar_prefetch = 0 : i64, scratch_operands = 0 : i64, tpu.core_type = #tpu.core_type<tc>, window_params = [{transform_indices = @transform_0, window_bounds = array<i64: 3, 256>}, {transform_indices = @transform_1, window_bounds = array<i64: 63, 256>}]} {
    %c0 = arith.constant 0 : index
    %c0_0 = arith.constant 0 : index
    %0 = vector.load %arg1[%c0, %c0_0] : memref<3x256xf32, #tpu.memory_space<vmem>>, vector<3x256xf32>
    %c0_1 = arith.constant 0 : index
    %c0_2 = arith.constant 0 : index
    %1 = vector.load %arg2[%c0_1, %c0_2] : memref<63x256xf32, #tpu.memory_space<vmem>>, vector<3x256xf32>
    tpu.vector_store %arg2[%c0_1, %c0_2], %0 {strides = array<i32>} : memref<63x256xf32, #tpu.memory_space<vmem>>, vector<3x256xf32>,
    %cst = arith.constant 1.000000e+00 : f32
    %2 = vector.broadcast %cst : f32 to vector<3x256xf32>
    %3 = arith.mulf %0, %2 : vector<3x256xf32>
    %4 = math.sin %3 : vector<3x256xf32>
    %c3 = arith.constant 3 : index
    %c0_3 = arith.constant 0 : index
    %5 = vector.load %arg2[%c3, %c0_3] : memref<63x256xf32, #tpu.memory_space<vmem>>, vector<3x256xf32>
    tpu.vector_store %arg2[%c3, %c0_3], %4 {strides = array<i32>} : memref<63x256xf32, #tpu.memory_space<vmem>>, vector<3x256xf32>,
    %6 = math.cos %3 : vector<3x256xf32>
    %c6 = arith.constant 6 : index
    %c0_4 = arith.constant 0 : index
    %7 = vector.load %arg2[%c6, %c0_4] : memref<63x256xf32, #tpu.memory_space<vmem>>, vector<3x256xf32>
    tpu.vector_store %arg2[%c6, %c0_4], %6 {strides = array<i32>} : memref<63x256xf32, #tpu.memory_space<vmem>>, vector<3x256xf32>,
    %cst_5 = arith.constant 57.7777786 : f32
    %8 = vector.broadcast %cst_5 : f32 to vector<3x256xf32>
    %9 = arith.mulf %0, %8 : vector<3x256xf32>
    %10 = math.sin %9 : vector<3x256xf32>
    %c9 = arith.constant 9 : index
    %c0_6 = arith.constant 0 : index
    %11 = vector.load %arg2[%c9, %c0_6] : memref<63x256xf32, #tpu.memory_space<vmem>>, vector<3x256xf32>
    tpu.vector_store %arg2[%c9, %c0_6], %10 {strides = array<i32>} : memref<63x256xf32, #tpu.memory_space<vmem>>, vector<3x256xf32>,
    %12 = math.cos %9 : vector<3x256xf32>
    %c12 = arith.constant 12 : index
    %c0_7 = arith.constant 0 : index
    %13 = vector.load %arg2[%c12, %c0_7] : memref<63x256xf32, #tpu.memory_space<vmem>>, vector<3x256xf32>
    tpu.vector_store %arg2[%c12, %c0_7], %12 {strides = array<i32>} : memref<63x256xf32, #tpu.memory_space<vmem>>, vector<3x256xf32>,
    %cst_8 = arith.constant 114.555557 : f32
    %14 = vector.broadcast %cst_8 : f32 to vector<3x256xf32>
    %15 = arith.mulf %0, %14 : vector<3x256xf32>
    %16 = math.sin %15 : vector<3x256xf32>
    %c15 = arith.constant 15 : index
    %c0_9 = arith.constant 0 : index
    %17 = vector.load %arg2[%c15, %c0_9] : memref<63x256xf32, #tpu.memory_space<vmem>>, vector<3x256xf32>
    tpu.vector_store %arg2[%c15, %c0_9], %16 {strides = array<i32>} : memref<63x256xf32, #tpu.memory_space<vmem>>, vector<3x256xf32>,
    %18 = math.cos %15 : vector<3x256xf32>
    %c18 = arith.constant 18 : index
    %c0_10 = arith.constant 0 : index
    %19 = vector.load %arg2[%c18, %c0_10] : memref<63x256xf32, #tpu.memory_space<vmem>>, vector<3x256xf32>
    tpu.vector_store %arg2[%c18, %c0_10], %18 {strides = array<i32>} : memref<63x256xf32, #tpu.memory_space<vmem>>, vector<3x256xf32>,
    %cst_11 = arith.constant 171.333328 : f32
    %20 = vector.broadcast %cst_11 : f32 to vector<3x256xf32>
    %21 = arith.mulf %0, %20 : vector<3x256xf32>
    %22 = math.sin %21 : vector<3x256xf32>
    %c21 = arith.constant 21 : index
    %c0_12 = arith.constant 0 : index
    %23 = vector.load %arg2[%c21, %c0_12] : memref<63x256xf32, #tpu.memory_space<vmem>>, vector<3x256xf32>
    tpu.vector_store %arg2[%c21, %c0_12], %22 {strides = array<i32>} : memref<63x256xf32, #tpu.memory_space<vmem>>, vector<3x256xf32>,
    %24 = math.cos %21 : vector<3x256xf32>
    %c24 = arith.constant 24 : index
    %c0_13 = arith.constant 0 : index
    %25 = vector.load %arg2[%c24, %c0_13] : memref<63x256xf32, #tpu.memory_space<vmem>>, vector<3x256xf32>
    tpu.vector_store %arg2[%c24, %c0_13], %24 {strides = array<i32>} : memref<63x256xf32, #tpu.memory_space<vmem>>, vector<3x256xf32>,
    %cst_14 = arith.constant 228.111115 : f32
    %26 = vector.broadcast %cst_14 : f32 to vector<3x256xf32>
    %27 = arith.mulf %0, %26 : vector<3x256xf32>
    %28 = math.sin %27 : vector<3x256xf32>
    %c27 = arith.constant 27 : index
    %c0_15 = arith.constant 0 : index
    %29 = vector.load %arg2[%c27, %c0_15] : memref<63x256xf32, #tpu.memory_space<vmem>>, vector<3x256xf32>
    tpu.vector_store %arg2[%c27, %c0_15], %28 {strides = array<i32>} : memref<63x256xf32, #tpu.memory_space<vmem>>, vector<3x256xf32>,
    %30 = math.cos %27 : vector<3x256xf32>
    %c30 = arith.constant 30 : index
    %c0_16 = arith.constant 0 : index
    %31 = vector.load %arg2[%c30, %c0_16] : memref<63x256xf32, #tpu.memory_space<vmem>>, vector<3x256xf32>
    tpu.vector_store %arg2[%c30, %c0_16], %30 {strides = array<i32>} : memref<63x256xf32, #tpu.memory_space<vmem>>, vector<3x256xf32>,
    %cst_17 = arith.constant 284.888885 : f32
    %32 = vector.broadcast %cst_17 : f32 to vector<3x256xf32>
    %33 = arith.mulf %0, %32 : vector<3x256xf32>
    %34 = math.sin %33 : vector<3x256xf32>
    %c33 = arith.constant 33 : index
    %c0_18 = arith.constant 0 : index
    %35 = vector.load %arg2[%c33, %c0_18] : memref<63x256xf32, #tpu.memory_space<vmem>>, vector<3x256xf32>
    tpu.vector_store %arg2[%c33, %c0_18], %34 {strides = array<i32>} : memref<63x256xf32, #tpu.memory_space<vmem>>, vector<3x256xf32>,
    %36 = math.cos %33 : vector<3x256xf32>
    %c36 = arith.constant 36 : index
    %c0_19 = arith.constant 0 : index
    %37 = vector.load %arg2[%c36, %c0_19] : memref<63x256xf32, #tpu.memory_space<vmem>>, vector<3x256xf32>
    tpu.vector_store %arg2[%c36, %c0_19], %36 {strides = array<i32>} : memref<63x256xf32, #tpu.memory_space<vmem>>, vector<3x256xf32>,
    %cst_20 = arith.constant 341.666656 : f32
    %38 = vector.broadcast %cst_20 : f32 to vector<3x256xf32>
    %39 = arith.mulf %0, %38 : vector<3x256xf32>
    %40 = math.sin %39 : vector<3x256xf32>
    %c39 = arith.constant 39 : index
    %c0_21 = arith.constant 0 : index
    %41 = vector.load %arg2[%c39, %c0_21] : memref<63x256xf32, #tpu.memory_space<vmem>>, vector<3x256xf32>
    tpu.vector_store %arg2[%c39, %c0_21], %40 {strides = array<i32>} : memref<63x256xf32, #tpu.memory_space<vmem>>, vector<3x256xf32>,
    %42 = math.cos %39 : vector<3x256xf32>
    %c42 = arith.constant 42 : index
    %c0_22 = arith.constant 0 : index
    %43 = vector.load %arg2[%c42, %c0_22] : memref<63x256xf32, #tpu.memory_space<vmem>>, vector<3x256xf32>
    tpu.vector_store %arg2[%c42, %c0_22], %42 {strides = array<i32>} : memref<63x256xf32, #tpu.memory_space<vmem>>, vector<3x256xf32>,
    %cst_23 = arith.constant 398.444458 : f32
    %44 = vector.broadcast %cst_23 : f32 to vector<3x256xf32>
    %45 = arith.mulf %0, %44 : vector<3x256xf32>
    %46 = math.sin %45 : vector<3x256xf32>
    %c45 = arith.constant 45 : index
    %c0_24 = arith.constant 0 : index
    %47 = vector.load %arg2[%c45, %c0_24] : memref<63x256xf32, #tpu.memory_space<vmem>>, vector<3x256xf32>
    tpu.vector_store %arg2[%c45, %c0_24], %46 {strides = array<i32>} : memref<63x256xf32, #tpu.memory_space<vmem>>, vector<3x256xf32>,
    %48 = math.cos %45 : vector<3x256xf32>
    %c48 = arith.constant 48 : index
    %c0_25 = arith.constant 0 : index
    %49 = vector.load %arg2[%c48, %c0_25] : memref<63x256xf32, #tpu.memory_space<vmem>>, vector<3x256xf32>
    tpu.vector_store %arg2[%c48, %c0_25], %48 {strides = array<i32>} : memref<63x256xf32, #tpu.memory_space<vmem>>, vector<3x256xf32>,
    %cst_26 = arith.constant 455.222229 : f32
    %50 = vector.broadcast %cst_26 : f32 to vector<3x256xf32>
    %51 = arith.mulf %0, %50 : vector<3x256xf32>
    %52 = math.sin %51 : vector<3x256xf32>
    %c51 = arith.constant 51 : index
    %c0_27 = arith.constant 0 : index
    %53 = vector.load %arg2[%c51, %c0_27] : memref<63x256xf32, #tpu.memory_space<vmem>>, vector<3x256xf32>
    tpu.vector_store %arg2[%c51, %c0_27], %52 {strides = array<i32>} : memref<63x256xf32, #tpu.memory_space<vmem>>, vector<3x256xf32>,
    %54 = math.cos %51 : vector<3x256xf32>
    %c54 = arith.constant 54 : index
    %c0_28 = arith.constant 0 : index
    %55 = vector.load %arg2[%c54, %c0_28] : memref<63x256xf32, #tpu.memory_space<vmem>>, vector<3x256xf32>
    tpu.vector_store %arg2[%c54, %c0_28], %54 {strides = array<i32>} : memref<63x256xf32, #tpu.memory_space<vmem>>, vector<3x256xf32>,
    %cst_29 = arith.constant 5.120000e+02 : f32
    %56 = vector.broadcast %cst_29 : f32 to vector<3x256xf32>
    %57 = arith.mulf %0, %56 : vector<3x256xf32>
    %58 = math.sin %57 : vector<3x256xf32>
    %c57 = arith.constant 57 : index
    %c0_30 = arith.constant 0 : index
    %59 = vector.load %arg2[%c57, %c0_30] : memref<63x256xf32, #tpu.memory_space<vmem>>, vector<3x256xf32>
    tpu.vector_store %arg2[%c57, %c0_30], %58 {strides = array<i32>} : memref<63x256xf32, #tpu.memory_space<vmem>>, vector<3x256xf32>,
    %60 = math.cos %57 : vector<3x256xf32>
    %c60 = arith.constant 60 : index
    %c0_31 = arith.constant 0 : index
    %61 = vector.load %arg2[%c60, %c0_31] : memref<63x256xf32, #tpu.memory_space<vmem>>, vector<3x256xf32>
    tpu.vector_store %arg2[%c60, %c0_31], %60 {strides = array<i32>} : memref<63x256xf32, #tpu.memory_space<vmem>>, vector<3x256xf32>,
    return
  }
  func.func @transform_0(%arg0: i32) -> (i32, i32) {
    %c0_i32 = arith.constant 0 : i32
    %c0_i32_0 = arith.constant 0 : i32
    return %c0_i32, %arg0 : i32, i32
  }
  func.func @transform_1(%arg0: i32) -> (i32, i32) {
    %c0_i32 = arith.constant 0 : i32
    %c0_i32_0 = arith.constant 0 : i32
    return %c0_i32, %arg0 : i32, i32
  }
}

</mosaic_0001>

<llo_original>
// kernel: tpu_custom_call.1
$region0: #{tpu_custom_call.1}
  #allocation0 [shape = 'u32[]', space=smem, size = 0x4, offset = 0x4, fixed_abs, tag = 'smem constant byte address 0x4 - core index']
  #allocation1 [shape = 'u32[144,128]{1,0:T(1,128)}', space=vmem, size = 0x12000, scoped, tag = 'internal scratch']
  %s0 = inlined_call_operand.hbm [shape: f32[3,256], index: 0, kind: input, shape index: {}]
  %s1 = inlined_call_operand.hbm [shape: f32[63,256], index: 1, kind: output, shape index: {}]
  %s2 = sld [smem:[#allocation0]]
  $region18: #{tpu_custom_call.1} parent=0
    _
  %s4 = ssub.s32 1, %s2
  %s5 = scalar_select 0, %s4, %s2
  $region1: #{tpu_custom_call.1} parent=0
    #allocation2 [shape = 'u8[4096]{0}', space=vmem, size = 0x1000, scoped, tag = 'input window, operand 0, single buffered']
    #allocation3 [shape = 's32[1]{0}', space=sflag, size = 0x4, scoped, tag = 'scoped memory for tpu_custom_call.1']
    #allocation4 [shape = 's32[1]{0}', space=sflag, size = 0x4, scoped, tag = 'scoped memory for tpu_custom_call.1']
    #allocation5 [shape = 'u8[65536]{0}', space=vmem, size = 0x10000, scoped, tag = 'output window, operand 0, single buffered']
    %6 = vsyncpa [#allocation3], 0
    %7 = vsyncpa [#allocation4], 0
    // Predicated region
    $region2: #{tpu_custom_call.1} parent=1 // pred_check
      _
    $region3: #{tpu_custom_call.1} parent=1 // pred_check_branch
      %9 = sbr.rel (0) target = $region5
    $region4: #{tpu_custom_call.1} parent=1 // pred_region
      %s11 = ssub.s32 128, 128
      %12 = vsyncadd [#allocation3], %s11
      %s14 = sshll.u32 [#allocation2], 4
      %s15 = int_to_ptr.vmem [resolvable:$true] %s14
      %17 = dma.hbm_to_vmem [thread:$0]  %s0, 128, %s15, [#allocation3]
    $region5: #{tpu_custom_call.1} parent=1 // pred_fallthru
      _
    // Predicated region
    $region6: #{tpu_custom_call.1} parent=1 // pred_check
      _
    $region7: #{tpu_custom_call.1} parent=1 // pred_check_branch
      %19 = sbr.rel (0) target = $region9
    $region8: #{tpu_custom_call.1} parent=1 // pred_region
      %20 = dma.done [#allocation3], 128
    $region9: #{tpu_custom_call.1} parent=1 // pred_fallthru
      _
    %v21 = vld [vmem:[#allocation2] sm:$0x77]
    %v23 = vcombine.high %v21, %v21
    %25 = vst [vmem:[#allocation5] sm:$0x7] %v21
    %26 = vst [vmem:[#allocation5 + $0x8] sm:$0x7] %v23
    %v27 = vand.u32 2147483647, %v21
    %vm28 = vcmp.le.f32.partialorder %v27, 0.7853982
    %vm29 = vcmp.lt.s32.totalorder %v21, 0
    %v30 = vand.u32 %v21, 2139095040
    %v31 = vshrl.u32 %v30, 23
    %v32 = vsub.s32 %v31, 127
    %v33 = vand.u32 2147483647, %v21
    %v34 = vand.u32 %v33, 8388607
    %v35 = vor.u32 %v34, 8388608
    %v36 = vsub.s32 0, %v35
    %v37 = vadd.s32 %v32, 1
    %vm38 = vcmp.gt.s32.totalorder %v37, 0
    %v39 = vsel %vm38, %v37, 0
    %v40 = vshrl.u32 %v39, 5
    %v41 = vand.u32 %v39, 31
    %v42 = vsub.s32 32, %v41
    %v43 = vshrl.u32 683565275, %v42
    %v44 = vshll.u32 683565275, %v41
    %v45 = vshrl.u32 2475754826, %v42
    %v46 = vor.u32 %v44, %v45
    %v47 = vshll.u32 2475754826, %v41
    %v48 = vshrl.u32 2131351028, %v42
    %v49 = vor.u32 %v47, %v48
    %v50 = vshll.u32 2131351028, %v41
    %v51 = vshrl.u32 2102212464, %v42
    %v52 = vor.u32 %v50, %v51
    %v53 = vshll.u32 2102212464, %v41
    %v54 = vshrl.u32 920167782, %v42
    %v55 = vor.u32 %v53, %v54
    %v56 = vshll.u32 920167782, %v41
    %v57 = vshrl.u32 1326507024, %v42
    %v58 = vor.u32 %v56, %v57
    %vm59 = vcmp.lt.s32.totalorder %v40, 1
    %vm60 = vcmp.lt.s32.totalorder %v40, 2
    %vm61 = vcmp.lt.s32.totalorder %v40, 3
    %vm62 = vcmp.lt.s32.totalorder %v40, 4
    %v63 = vsel %vm59, %v43, %v46
    %v64 = vsel %vm62, %v52, 2102212464
    %v65 = vsel %vm61, %v49, %v64
    %v66 = vsel %vm60, %v63, %v65
    %v67 = vsel %vm59, %v46, %v49
    %v68 = vsel %vm62, %v55, 920167782
    %v69 = vsel %vm61, %v52, %v68
    %v70 = vsel %vm60, %v67, %v69
    %v71 = vsel %vm59, %v49, %v52
    %v72 = vsel %vm62, %v58, 1326507024
    %v73 = vsel %vm61, %v55, %v72
    %v74 = vsel %vm60, %v71, %v73
    %v75 = vshll.u32 %v35, 8
    %v76 = vmul.u32.u64.compose %v75, %v74
    %v77 = vextract.low.u32 %v76
    %v78 = vextract.high.u32 %v76
    %v79 = vmul.u32.u64.compose %v75, %v70
    %v80 = vextract.low.u32 %v79
    %v81 = vextract.high.u32 %v79
    %v82 = vmul.u32 %v75, %v66
    %v83 = vadd.s32 %v78, %v80
    %vm84 = vc.u32 %v78, %v80
    %v85 = vadd.s32 %v81, 1
    %v86 = vsel %vm84, %v85, %v81
    %v87 = vadd.s32 %v82, %v86
    %v88 = vadd.s32 %v87, 536870912
    %v89 = vshrl.u32 %v88, 30
    %v90 = vshll.u32 %v89, 30
    %v91 = vsub.s32 %v87, %v90
    %vm92 = vcmp.lt.s32.totalorder %v91, 0
    %v93 = vsub.s32 0, %v91
    %v94 = vsel %vm92, %v93, %v91
    %v95 = vclz %v94
    %v96 = vsub.s32 %v95, 2
    %vm97 = vcmp.gt.s32.totalorder 0, %v96
    %v98 = vsel %vm97, 0, %v96
    %v99 = vsub.s32 32, %v98
    %v100 = vshll.u32 %v91, %v98
    %v101 = vshrl.u32 %v83, %v99
    %v102 = vor.u32 %v100, %v101
    %v103 = vsub.s32 4294967266, %v98
    %v104 = vadd.s32 %v103, 127
    %v105 = vshll.u32 %v104, 23
    %v106 = vor.u32 4788187, %v105
    %v107 = vand.u32 2147483647, %v106
    %v109 = vcvt.s32.f32 %v102
    %v110 = vmul.f32 %v109, %v107
    %v111 = vxor.u32 %v110, 2147483648
    %v112 = vsel %vm29, %v111, %v110
    %v113 = vsub.s32 4, %v89
    %v114 = vsel %vm29, %v113, %v89
    %v115 = vsel %vm28, %v21, %v112
    %v116 = vsel %vm28, 0, %v114
    %v117 = vcosq.f32.pop %v115
    %v118 = vsinq.f32.pop %v115
    %vm119 = vweird.f32 %v21
    %v120 = vadd.s32 %v116, 3
    %v121 = vand.u32 %v120, 3
    %vm122 = vcmp.lt.s32.totalorder %v121, 2
    %vm123 = vcmp.eq.s32.totalorder %v121, 0
    %v124 = vxor.u32 %v118, 2147483648
    %v125 = vsel %vm123, %v117, %v124
    %vm126 = vcmp.eq.s32.totalorder %v121, 2
    %v127 = vxor.u32 %v117, 2147483648
    %v128 = vsel %vm126, %v127, %v118
    %v129 = vsel %vm122, %v125, %v128
    %v130 = vsel %vm119, nan, %v129
    %v132 = vcombine.high %v130, %v130
    %v133 = vrot.slane %v130, 5
    %v134 = vrot.slane %v132, 5
    %137 = vst [vmem:[#allocation5] sm:$0x38] %v133
    %138 = vst [vmem:[#allocation5 + $0x8] sm:$0x38] %v134
    %v139 = vand.u32 2147483647, %v21
    %vm140 = vcmp.le.f32.partialorder %v139, 0.7853982
    %vm141 = vcmp.lt.s32.totalorder %v21, 0
    %v142 = vand.u32 %v21, 2139095040
    %v143 = vshrl.u32 %v142, 23
    %v144 = vsub.s32 %v143, 127
    %v145 = vand.u32 2147483647, %v21
    %v146 = vand.u32 %v145, 8388607
    %v147 = vor.u32 %v146, 8388608
    %v148 = vsub.s32 0, %v147
    %v149 = vadd.s32 %v144, 1
    %vm150 = vcmp.gt.s32.totalorder %v149, 0
    %v151 = vsel %vm150, %v149, 0
    %v152 = vshrl.u32 %v151, 5
    %v153 = vand.u32 %v151, 31
    %v154 = vsub.s32 32, %v153
    %v155 = vshrl.u32 683565275, %v154
    %v156 = vshll.u32 683565275, %v153
    %v157 = vshrl.u32 2475754826, %v154
    %v158 = vor.u32 %v156, %v157
    %v159 = vshll.u32 2475754826, %v153
    %v160 = vshrl.u32 2131351028, %v154
    %v161 = vor.u32 %v159, %v160
    %v162 = vshll.u32 2131351028, %v153
    %v163 = vshrl.u32 2102212464, %v154
    %v164 = vor.u32 %v162, %v163
    %v165 = vshll.u32 2102212464, %v153
    %v166 = vshrl.u32 920167782, %v154
    %v167 = vor.u32 %v165, %v166
    %v168 = vshll.u32 920167782, %v153
    %v169 = vshrl.u32 1326507024, %v154
    %v170 = vor.u32 %v168, %v169
    %vm171 = vcmp.lt.s32.totalorder %v152, 1
    %vm172 = vcmp.lt.s32.totalorder %v152, 2
    %vm173 = vcmp.lt.s32.totalorder %v152, 3
    %vm174 = vcmp.lt.s32.totalorder %v152, 4
    %v175 = vsel %vm171, %v155, %v158
    %v176 = vsel %vm174, %v164, 2102212464
    %v177 = vsel %vm173, %v161, %v176
    %v178 = vsel %vm172, %v175, %v177
    %v179 = vsel %vm171, %v158, %v161
    %v180 = vsel %vm174, %v167, 920167782
    %v181 = vsel %vm173, %v164, %v180
    %v182 = vsel %vm172, %v179, %v181
    %v183 = vsel %vm171, %v161, %v164
    %v184 = vsel %vm174, %v170, 1326507024
    %v185 = vsel %vm173, %v167, %v184
    %v186 = vsel %vm172, %v183, %v185
    %v187 = vshll.u32 %v147, 8
    %v188 = vmul.u32.u64.compose %v187, %v186
    %v189 = vextract.low.u32 %v188
    %v190 = vextract.high.u32 %v188
    %v191 = vmul.u32.u64.compose %v187, %v182
    %v192 = vextract.low.u32 %v191
    %v193 = vextract.high.u32 %v191
    %v194 = vmul.u32 %v187, %v178
    %v195 = vadd.s32 %v190, %v192
    %vm196 = vc.u32 %v190, %v192
    %v197 = vadd.s32 %v193, 1
    %v198 = vsel %vm196, %v197, %v193
    %v199 = vadd.s32 %v194, %v198
    %v200 = vadd.s32 %v199, 536870912
    %v201 = vshrl.u32 %v200, 30
    %v202 = vshll.u32 %v201, 30
    %v203 = vsub.s32 %v199, %v202
    %vm204 = vcmp.lt.s32.totalorder %v203, 0
    %v205 = vsub.s32 0, %v203
    %v206 = vsel %vm204, %v205, %v203
    %v207 = vclz %v206
    %v208 = vsub.s32 %v207, 2
    %vm209 = vcmp.gt.s32.totalorder 0, %v208
    %v210 = vsel %vm209, 0, %v208
    %v211 = vsub.s32 32, %v210
    %v212 = vshll.u32 %v203, %v210
    %v213 = vshrl.u32 %v195, %v211
    %v214 = vor.u32 %v212, %v213
    %v215 = vsub.s32 4294967266, %v210
    %v216 = vadd.s32 %v215, 127
    %v217 = vshll.u32 %v216, 23
    %v218 = vor.u32 4788187, %v217
    %v219 = vand.u32 2147483647, %v218
    %v221 = vcvt.s32.f32 %v214
    %v222 = vmul.f32 %v221, %v219
    %v223 = vxor.u32 %v222, 2147483648
    %v224 = vsel %vm141, %v223, %v222
    %v225 = vsub.s32 4, %v201
    %v226 = vsel %vm141, %v225, %v201
    %v227 = vsel %vm140, %v21, %v224
    %v228 = vsel %vm140, 0, %v226
    %v229 = vcosq.f32.pop %v227
    %v230 = vsinq.f32.pop %v227
    %vm231 = vweird.f32 %v21
    %v232 = vand.u32 %v228, 3
    %vm233 = vcmp.lt.s32.totalorder %v232, 2
    %vm234 = vcmp.eq.s32.totalorder %v232, 0
    %v235 = vxor.u32 %v230, 2147483648
    %v236 = vsel %vm234, %v229, %v235
    %vm237 = vcmp.eq.s32.totalorder %v232, 2
    %v238 = vxor.u32 %v229, 2147483648
    %v239 = vsel %vm237, %v238, %v230
    %v240 = vsel %vm233, %v236, %v239
    %v241 = vsel %vm231, nan, %v240
    %v243 = vcombine.high %v241, %v241
    %v244 = vrot.slane %v241, 2
    %v245 = vrot.slane %v243, 2
    %248 = vst [vmem:[#allocation5] sm:$0xc0] %v244
    %249 = vst [vmem:[#allocation5 + $0x8] sm:$0xc0] %v245
    %250 = vst [vmem:[#allocation5 + $0x10] sm:$0x1] %v244
    %251 = vst [vmem:[#allocation5 + $0x18] sm:$0x1] %v245
    %v252 = vmul.f32 %v21, 57.77778
    %v253 = vand.u32 2147483647, %v252
    %vm254 = vcmp.le.f32.partialorder %v253, 0.7853982
    %vm255 = vcmp.lt.s32.totalorder %v252, 0
    %v256 = vand.u32 %v252, 2139095040
    %v257 = vshrl.u32 %v256, 23
    %v258 = vsub.s32 %v257, 127
    %v259 = vand.u32 2147483647, %v252
    %v260 = vand.u32 %v259, 8388607
    %v261 = vor.u32 %v260, 8388608
    %v262 = vsub.s32 0, %v261
    %v263 = vadd.s32 %v258, 1
    %vm264 = vcmp.gt.s32.totalorder %v263, 0
    %v265 = vsel %vm264, %v263, 0
    %v266 = vshrl.u32 %v265, 5
    %v267 = vand.u32 %v265, 31
    %v268 = vsub.s32 32, %v267
    %v269 = vshrl.u32 683565275, %v268
    %v270 = vshll.u32 683565275, %v267
    %v271 = vshrl.u32 2475754826, %v268
    %v272 = vor.u32 %v270, %v271
    %v273 = vshll.u32 2475754826, %v267
    %v274 = vshrl.u32 2131351028, %v268
    %v275 = vor.u32 %v273, %v274
    %v276 = vshll.u32 2131351028, %v267
    %v277 = vshrl.u32 2102212464, %v268
    %v278 = vor.u32 %v276, %v277
    %v279 = vshll.u32 2102212464, %v267
    %v280 = vshrl.u32 920167782, %v268
    %v281 = vor.u32 %v279, %v280
    %v282 = vshll.u32 920167782, %v267
    %v283 = vshrl.u32 1326507024, %v268
    %v284 = vor.u32 %v282, %v283
    %vm285 = vcmp.lt.s32.totalorder %v266, 1
    %vm286 = vcmp.lt.s32.totalorder %v266, 2
    %vm287 = vcmp.lt.s32.totalorder %v266, 3
    %vm288 = vcmp.lt.s32.totalorder %v266, 4
    %v289 = vsel %vm285, %v269, %v272
    %v290 = vsel %vm288, %v278, 2102212464
    %v291 = vsel %vm287, %v275, %v290
    %v292 = vsel %vm286, %v289, %v291
    %v293 = vsel %vm285, %v272, %v275
    %v294 = vsel %vm288, %v281, 920167782
    %v295 = vsel %vm287, %v278, %v294
    %v296 = vsel %vm286, %v293, %v295
    %v297 = vsel %vm285, %v275, %v278
    %v298 = vsel %vm288, %v284, 1326507024
    %v299 = vsel %vm287, %v281, %v298
    %v300 = vsel %vm286, %v297, %v299
    %v301 = vshll.u32 %v261, 8
    %v302 = vmul.u32.u64.compose %v301, %v300
    %v303 = vextract.low.u32 %v302
    %v304 = vextract.high.u32 %v302
    %v305 = vmul.u32.u64.compose %v301, %v296
    %v306 = vextract.low.u32 %v305
    %v307 = vextract.high.u32 %v305
    %v308 = vmul.u32 %v301, %v292
    %v309 = vadd.s32 %v304, %v306
    %vm310 = vc.u32 %v304, %v306
    %v311 = vadd.s32 %v307, 1
    %v312 = vsel %vm310, %v311, %v307
    %v313 = vadd.s32 %v308, %v312
    %v314 = vadd.s32 %v313, 536870912
    %v315 = vshrl.u32 %v314, 30
    %v316 = vshll.u32 %v315, 30
    %v317 = vsub.s32 %v313, %v316
    %vm318 = vcmp.lt.s32.totalorder %v317, 0
    %v319 = vsub.s32 0, %v317
    %v320 = vsel %vm318, %v319, %v317
    %v321 = vclz %v320
    %v322 = vsub.s32 %v321, 2
    %vm323 = vcmp.gt.s32.totalorder 0, %v322
    %v324 = vsel %vm323, 0, %v322
    %v325 = vsub.s32 32, %v324
    %v326 = vshll.u32 %v317, %v324
    %v327 = vshrl.u32 %v309, %v325
    %v328 = vor.u32 %v326, %v327
    %v329 = vsub.s32 4294967266, %v324
    %v330 = vadd.s32 %v329, 127
    %v331 = vshll.u32 %v330, 23
    %v332 = vor.u32 4788187, %v331
    %v333 = vand.u32 2147483647, %v332
    %v335 = vcvt.s32.f32 %v328
    %v336 = vmul.f32 %v335, %v333
    %v337 = vxor.u32 %v336, 2147483648
    %v338 = vsel %vm255, %v337, %v336
    %v339 = vsub.s32 4, %v315
    %v340 = vsel %vm255, %v339, %v315
    %v341 = vsel %vm254, %v252, %v338
    %v342 = vsel %vm254, 0, %v340
    %v343 = vcosq.f32.pop %v341
    %v344 = vsinq.f32.pop %v341
    %vm345 = vweird.f32 %v252
    %v346 = vadd.s32 %v342, 3
    %v347 = vand.u32 %v346, 3
    %vm348 = vcmp.lt.s32.totalorder %v347, 2
    %vm349 = vcmp.eq.s32.totalorder %v347, 0
    %v350 = vxor.u32 %v344, 2147483648
    %v351 = vsel %vm349, %v343, %v350
    %vm352 = vcmp.eq.s32.totalorder %v347, 2
    %v353 = vxor.u32 %v343, 2147483648
    %v354 = vsel %vm352, %v353, %v344
    %v355 = vsel %vm348, %v351, %v354
    %v356 = vsel %vm345, nan, %v355
    %v358 = vcombine.high %v356, %v356
    %v359 = vrot.slane %v356, 7
    %v360 = vrot.slane %v358, 7
    %363 = vst [vmem:[#allocation5 + $0x10] sm:$0xe] %v359
    %364 = vst [vmem:[#allocation5 + $0x18] sm:$0xe] %v360
    %v365 = vand.u32 2147483647, %v252
    %vm366 = vcmp.le.f32.partialorder %v365, 0.7853982
    %vm367 = vcmp.lt.s32.totalorder %v252, 0
    %v368 = vand.u32 %v252, 2139095040
    %v369 = vshrl.u32 %v368, 23
    %v370 = vsub.s32 %v369, 127
    %v371 = vand.u32 2147483647, %v252
    %v372 = vand.u32 %v371, 8388607
    %v373 = vor.u32 %v372, 8388608
    %v374 = vsub.s32 0, %v373
    %v375 = vadd.s32 %v370, 1
    %vm376 = vcmp.gt.s32.totalorder %v375, 0
    %v377 = vsel %vm376, %v375, 0
    %v378 = vshrl.u32 %v377, 5
    %v379 = vand.u32 %v377, 31
    %v380 = vsub.s32 32, %v379
    %v381 = vshrl.u32 683565275, %v380
    %v382 = vshll.u32 683565275, %v379
    %v383 = vshrl.u32 2475754826, %v380
    %v384 = vor.u32 %v382, %v383
    %v385 = vshll.u32 2475754826, %v379
    %v386 = vshrl.u32 2131351028, %v380
    %v387 = vor.u32 %v385, %v386
    %v388 = vshll.u32 2131351028, %v379
    %v389 = vshrl.u32 2102212464, %v380
    %v390 = vor.u32 %v388, %v389
    %v391 = vshll.u32 2102212464, %v379
    %v392 = vshrl.u32 920167782, %v380
    %v393 = vor.u32 %v391, %v392
    %v394 = vshll.u32 920167782, %v379
    %v395 = vshrl.u32 1326507024, %v380
    %v396 = vor.u32 %v394, %v395
    %vm397 = vcmp.lt.s32.totalorder %v378, 1
    %vm398 = vcmp.lt.s32.totalorder %v378, 2
    %vm399 = vcmp.lt.s32.totalorder %v378, 3
    %vm400 = vcmp.lt.s32.totalorder %v378, 4
    %v401 = vsel %vm397, %v381, %v384
    %v402 = vsel %vm400, %v390, 2102212464
    %v403 = vsel %vm399, %v387, %v402
    %v404 = vsel %vm398, %v401, %v403
    %v405 = vsel %vm397, %v384, %v387
    %v406 = vsel %vm400, %v393, 920167782
    %v407 = vsel %vm399, %v390, %v406
    %v408 = vsel %vm398, %v405, %v407
    %v409 = vsel %vm397, %v387, %v390
    %v410 = vsel %vm400, %v396, 1326507024
    %v411 = vsel %vm399, %v393, %v410
    %v412 = vsel %vm398, %v409, %v411
    %v413 = vshll.u32 %v373, 8
    %v414 = vmul.u32.u64.compose %v413, %v412
    %v415 = vextract.low.u32 %v414
    %v416 = vextract.high.u32 %v414
    %v417 = vmul.u32.u64.compose %v413, %v408
    %v418 = vextract.low.u32 %v417
    %v419 = vextract.high.u32 %v417
    %v420 = vmul.u32 %v413, %v404
    %v421 = vadd.s32 %v416, %v418
    %vm422 = vc.u32 %v416, %v418
    %v423 = vadd.s32 %v419, 1
    %v424 = vsel %vm422, %v423, %v419
    %v425 = vadd.s32 %v420, %v424
    %v426 = vadd.s32 %v425, 536870912
    %v427 = vshrl.u32 %v426, 30
    %v428 = vshll.u32 %v427, 30
    %v429 = vsub.s32 %v425, %v428
    %vm430 = vcmp.lt.s32.totalorder %v429, 0
    %v431 = vsub.s32 0, %v429
    %v432 = vsel %vm430, %v431, %v429
    %v433 = vclz %v432
    %v434 = vsub.s32 %v433, 2
    %vm435 = vcmp.gt.s32.totalorder 0, %v434
    %v436 = vsel %vm435, 0, %v434
    %v437 = vsub.s32 32, %v436
    %v438 = vshll.u32 %v429, %v436
    %v439 = vshrl.u32 %v421, %v437
    %v440 = vor.u32 %v438, %v439
    %v441 = vsub.s32 4294967266, %v436
    %v442 = vadd.s32 %v441, 127
    %v443 = vshll.u32 %v442, 23
    %v444 = vor.u32 4788187, %v443
    %v445 = vand.u32 2147483647, %v444
    %v447 = vcvt.s32.f32 %v440
    %v448 = vmul.f32 %v447, %v445
    %v449 = vxor.u32 %v448, 2147483648
    %v450 = vsel %vm367, %v449, %v448
    %v451 = vsub.s32 4, %v427
    %v452 = vsel %vm367, %v451, %v427
    %v453 = vsel %vm366, %v252, %v450
    %v454 = vsel %vm366, 0, %v452
    %v455 = vcosq.f32.pop %v453
    %v456 = vsinq.f32.pop %v453
    %vm457 = vweird.f32 %v252
    %v458 = vand.u32 %v454, 3
    %vm459 = vcmp.lt.s32.totalorder %v458, 2
    %vm460 = vcmp.eq.s32.totalorder %v458, 0
    %v461 = vxor.u32 %v456, 2147483648
    %v462 = vsel %vm460, %v455, %v461
    %vm463 = vcmp.eq.s32.totalorder %v458, 2
    %v464 = vxor.u32 %v455, 2147483648
    %v465 = vsel %vm463, %v464, %v456
    %v466 = vsel %vm459, %v462, %v465
    %v467 = vsel %vm457, nan, %v466
    %v469 = vcombine.low %v467, %v467
    %471 = vst [vmem:[#allocation5 + $0x10] sm:$0x70] %v469
    %472 = vst [vmem:[#allocation5 + $0x18] sm:$0x70] %v467
    %v473 = vmul.f32 %v21, 114.55556
    %v474 = vand.u32 2147483647, %v473
    %vm475 = vcmp.le.f32.partialorder %v474, 0.7853982
    %vm476 = vcmp.lt.s32.totalorder %v473, 0
    %v477 = vand.u32 %v473, 2139095040
    %v478 = vshrl.u32 %v477, 23
    %v479 = vsub.s32 %v478, 127
    %v480 = vand.u32 2147483647, %v473
    %v481 = vand.u32 %v480, 8388607
    %v482 = vor.u32 %v481, 8388608
    %v483 = vsub.s32 0, %v482
    %v484 = vadd.s32 %v479, 1
    %vm485 = vcmp.gt.s32.totalorder %v484, 0
    %v486 = vsel %vm485, %v484, 0
    %v487 = vshrl.u32 %v486, 5
    %v488 = vand.u32 %v486, 31
    %v489 = vsub.s32 32, %v488
    %v490 = vshrl.u32 683565275, %v489
    %v491 = vshll.u32 683565275, %v488
    %v492 = vshrl.u32 2475754826, %v489
    %v493 = vor.u32 %v491, %v492
    %v494 = vshll.u32 2475754826, %v488
    %v495 = vshrl.u32 2131351028, %v489
    %v496 = vor.u32 %v494, %v495
    %v497 = vshll.u32 2131351028, %v488
    %v498 = vshrl.u32 2102212464, %v489
    %v499 = vor.u32 %v497, %v498
    %v500 = vshll.u32 2102212464, %v488
    %v501 = vshrl.u32 920167782, %v489
    %v502 = vor.u32 %v500, %v501
    %v503 = vshll.u32 920167782, %v488
    %v504 = vshrl.u32 1326507024, %v489
    %v505 = vor.u32 %v503, %v504
    %vm506 = vcmp.lt.s32.totalorder %v487, 1
    %vm507 = vcmp.lt.s32.totalorder %v487, 2
    %vm508 = vcmp.lt.s32.totalorder %v487, 3
    %vm509 = vcmp.lt.s32.totalorder %v487, 4
    %v510 = vsel %vm506, %v490, %v493
    %v511 = vsel %vm509, %v499, 2102212464
    %v512 = vsel %vm508, %v496, %v511
    %v513 = vsel %vm507, %v510, %v512
    %v514 = vsel %vm506, %v493, %v496
    %v515 = vsel %vm509, %v502, 920167782
    %v516 = vsel %vm508, %v499, %v515
    %v517 = vsel %vm507, %v514, %v516
    %v518 = vsel %vm506, %v496, %v499
    %v519 = vsel %vm509, %v505, 1326507024
    %v520 = vsel %vm508, %v502, %v519
    %v521 = vsel %vm507, %v518, %v520
    %v522 = vshll.u32 %v482, 8
    %v523 = vmul.u32.u64.compose %v522, %v521
    %v524 = vextract.low.u32 %v523
    %v525 = vextract.high.u32 %v523
    %v526 = vmul.u32.u64.compose %v522, %v517
    %v527 = vextract.low.u32 %v526
    %v528 = vextract.high.u32 %v526
    %v529 = vmul.u32 %v522, %v513
    %v530 = vadd.s32 %v525, %v527
    %vm531 = vc.u32 %v525, %v527
    %v532 = vadd.s32 %v528, 1
    %v533 = vsel %vm531, %v532, %v528
    %v534 = vadd.s32 %v529, %v533
    %v535 = vadd.s32 %v534, 536870912
    %v536 = vshrl.u32 %v535, 30
    %v537 = vshll.u32 %v536, 30
    %v538 = vsub.s32 %v534, %v537
    %vm539 = vcmp.lt.s32.totalorder %v538, 0
    %v540 = vsub.s32 0, %v538
    %v541 = vsel %vm539, %v540, %v538
    %v542 = vclz %v541
    %v543 = vsub.s32 %v542, 2
    %vm544 = vcmp.gt.s32.totalorder 0, %v543
    %v545 = vsel %vm544, 0, %v543
    %v546 = vsub.s32 32, %v545
    %v547 = vshll.u32 %v538, %v545
    %v548 = vshrl.u32 %v530, %v546
    %v549 = vor.u32 %v547, %v548
    %v550 = vsub.s32 4294967266, %v545
    %v551 = vadd.s32 %v550, 127
    %v552 = vshll.u32 %v551, 23
    %v553 = vor.u32 4788187, %v552
    %v554 = vand.u32 2147483647, %v553
    %v556 = vcvt.s32.f32 %v549
    %v557 = vmul.f32 %v556, %v554
    %v558 = vxor.u32 %v557, 2147483648
    %v559 = vsel %vm476, %v558, %v557
    %v560 = vsub.s32 4, %v536
    %v561 = vsel %vm476, %v560, %v536
    %v562 = vsel %vm475, %v473, %v559
    %v563 = vsel %vm475, 0, %v561
    %v564 = vcosq.f32.pop %v562
    %v565 = vsinq.f32.pop %v562
    %vm566 = vweird.f32 %v473
    %v567 = vadd.s32 %v563, 3
    %v568 = vand.u32 %v567, 3
    %vm569 = vcmp.lt.s32.totalorder %v568, 2
    %vm570 = vcmp.eq.s32.totalorder %v568, 0
    %v571 = vxor.u32 %v565, 2147483648
    %v572 = vsel %vm570, %v564, %v571
    %vm573 = vcmp.eq.s32.totalorder %v568, 2
    %v574 = vxor.u32 %v564, 2147483648
    %v575 = vsel %vm573, %v574, %v565
    %v576 = vsel %vm569, %v572, %v575
    %v577 = vsel %vm566, nan, %v576
    %v579 = vcombine.high %v577, %v577
    %v580 = vrot.slane %v577, 1
    %v581 = vrot.slane %v579, 1
    %584 = vst [vmem:[#allocation5 + $0x10] sm:$0x80] %v580
    %585 = vst [vmem:[#allocation5 + $0x18] sm:$0x80] %v581
    %586 = vst [vmem:[#allocation5 + $0x20] sm:$0x3] %v580
    %587 = vst [vmem:[#allocation5 + $0x28] sm:$0x3] %v581
    %v588 = vand.u32 2147483647, %v473
    %vm589 = vcmp.le.f32.partialorder %v588, 0.7853982
    %vm590 = vcmp.lt.s32.totalorder %v473, 0
    %v591 = vand.u32 %v473, 2139095040
    %v592 = vshrl.u32 %v591, 23
    %v593 = vsub.s32 %v592, 127
    %v594 = vand.u32 2147483647, %v473
    %v595 = vand.u32 %v594, 8388607
    %v596 = vor.u32 %v595, 8388608
    %v597 = vsub.s32 0, %v596
    %v598 = vadd.s32 %v593, 1
    %vm599 = vcmp.gt.s32.totalorder %v598, 0
    %v600 = vsel %vm599, %v598, 0
    %v601 = vshrl.u32 %v600, 5
    %v602 = vand.u32 %v600, 31
    %v603 = vsub.s32 32, %v602
    %v604 = vshrl.u32 683565275, %v603
    %v605 = vshll.u32 683565275, %v602
    %v606 = vshrl.u32 2475754826, %v603
    %v607 = vor.u32 %v605, %v606
    %v608 = vshll.u32 2475754826, %v602
    %v609 = vshrl.u32 2131351028, %v603
    %v610 = vor.u32 %v608, %v609
    %v611 = vshll.u32 2131351028, %v602
    %v612 = vshrl.u32 2102212464, %v603
    %v613 = vor.u32 %v611, %v612
    %v614 = vshll.u32 2102212464, %v602
    %v615 = vshrl.u32 920167782, %v603
    %v616 = vor.u32 %v614, %v615
    %v617 = vshll.u32 920167782, %v602
    %v618 = vshrl.u32 1326507024, %v603
    %v619 = vor.u32 %v617, %v618
    %vm620 = vcmp.lt.s32.totalorder %v601, 1
    %vm621 = vcmp.lt.s32.totalorder %v601, 2
    %vm622 = vcmp.lt.s32.totalorder %v601, 3
    %vm623 = vcmp.lt.s32.totalorder %v601, 4
    %v624 = vsel %vm620, %v604, %v607
    %v625 = vsel %vm623, %v613, 2102212464
    %v626 = vsel %vm622, %v610, %v625
    %v627 = vsel %vm621, %v624, %v626
    %v628 = vsel %vm620, %v607, %v610
    %v629 = vsel %vm623, %v616, 920167782
    %v630 = vsel %vm622, %v613, %v629
    %v631 = vsel %vm621, %v628, %v630
    %v632 = vsel %vm620, %v610, %v613
    %v633 = vsel %vm623, %v619, 1326507024
    %v634 = vsel %vm622, %v616, %v633
    %v635 = vsel %vm621, %v632, %v634
    %v636 = vshll.u32 %v596, 8
    %v637 = vmul.u32.u64.compose %v636, %v635
    %v638 = vextract.low.u32 %v637
    %v639 = vextract.high.u32 %v637
    %v640 = vmul.u32.u64.compose %v636, %v631
    %v641 = vextract.low.u32 %v640
    %v642 = vextract.high.u32 %v640
    %v643 = vmul.u32 %v636, %v627
    %v644 = vadd.s32 %v639, %v641
    %vm645 = vc.u32 %v639, %v641
    %v646 = vadd.s32 %v642, 1
    %v647 = vsel %vm645, %v646, %v642
    %v648 = vadd.s32 %v643, %v647
    %v649 = vadd.s32 %v648, 536870912
    %v650 = vshrl.u32 %v649, 30
    %v651 = vshll.u32 %v650, 30
    %v652 = vsub.s32 %v648, %v651
    %vm653 = vcmp.lt.s32.totalorder %v652, 0
    %v654 = vsub.s32 0, %v652
    %v655 = vsel %vm653, %v654, %v652
    %v656 = vclz %v655
    %v657 = vsub.s32 %v656, 2
    %vm658 = vcmp.gt.s32.totalorder 0, %v657
    %v659 = vsel %vm658, 0, %v657
    %v660 = vsub.s32 32, %v659
    %v661 = vshll.u32 %v652, %v659
    %v662 = vshrl.u32 %v644, %v660
    %v663 = vor.u32 %v661, %v662
    %v664 = vsub.s32 4294967266, %v659
    %v665 = vadd.s32 %v664, 127
    %v666 = vshll.u32 %v665, 23
    %v667 = vor.u32 4788187, %v666
    %v668 = vand.u32 2147483647, %v667
    %v670 = vcvt.s32.f32 %v663
    %v671 = vmul.f32 %v670, %v668
    %v672 = vxor.u32 %v671, 2147483648
    %v673 = vsel %vm590, %v672, %v671
    %v674 = vsub.s32 4, %v650
    %v675 = vsel %vm590, %v674, %v650
    %v676 = vsel %vm589, %v473, %v673
    %v677 = vsel %vm589, 0, %v675
    %v678 = vcosq.f32.pop %v676
    %v679 = vsinq.f32.pop %v676
    %vm680 = vweird.f32 %v473
    %v681 = vand.u32 %v677, 3
    %vm682 = vcmp.lt.s32.totalorder %v681, 2
    %vm683 = vcmp.eq.s32.totalorder %v681, 0
    %v684 = vxor.u32 %v679, 2147483648
    %v685 = vsel %vm683, %v678, %v684
    %vm686 = vcmp.eq.s32.totalorder %v681, 2
    %v687 = vxor.u32 %v678, 2147483648
    %v688 = vsel %vm686, %v687, %v679
    %v689 = vsel %vm682, %v685, %v688
    %v690 = vsel %vm680, nan, %v689
    %v692 = vcombine.high %v690, %v690
    %v693 = vrot.slane %v690, 6
    %v694 = vrot.slane %v692, 6
    %697 = vst [vmem:[#allocation5 + $0x20] sm:$0x1c] %v693
    %698 = vst [vmem:[#allocation5 + $0x28] sm:$0x1c] %v694
    %v699 = vmul.f32 %v21, 171.33333
    %v700 = vand.u32 2147483647, %v699
    %vm701 = vcmp.le.f32.partialorder %v700, 0.7853982
    %vm702 = vcmp.lt.s32.totalorder %v699, 0
    %v703 = vand.u32 %v699, 2139095040
    %v704 = vshrl.u32 %v703, 23
    %v705 = vsub.s32 %v704, 127
    %v706 = vand.u32 2147483647, %v699
    %v707 = vand.u32 %v706, 8388607
    %v708 = vor.u32 %v707, 8388608
    %v709 = vsub.s32 0, %v708
    %v710 = vadd.s32 %v705, 1
    %vm711 = vcmp.gt.s32.totalorder %v710, 0
    %v712 = vsel %vm711, %v710, 0
    %v713 = vshrl.u32 %v712, 5
    %v714 = vand.u32 %v712, 31
    %v715 = vsub.s32 32, %v714
    %v716 = vshrl.u32 683565275, %v715
    %v717 = vshll.u32 683565275, %v714
    %v718 = vshrl.u32 2475754826, %v715
    %v719 = vor.u32 %v717, %v718
    %v720 = vshll.u32 2475754826, %v714
    %v721 = vshrl.u32 2131351028, %v715
    %v722 = vor.u32 %v720, %v721
    %v723 = vshll.u32 2131351028, %v714
    %v724 = vshrl.u32 2102212464, %v715
    %v725 = vor.u32 %v723, %v724
    %v726 = vshll.u32 2102212464, %v714
    %v727 = vshrl.u32 920167782, %v715
    %v728 = vor.u32 %v726, %v727
    %v729 = vshll.u32 920167782, %v714
    %v730 = vshrl.u32 1326507024, %v715
    %v731 = vor.u32 %v729, %v730
    %vm732 = vcmp.lt.s32.totalorder %v713, 1
    %vm733 = vcmp.lt.s32.totalorder %v713, 2
    %vm734 = vcmp.lt.s32.totalorder %v713, 3
    %vm735 = vcmp.lt.s32.totalorder %v713, 4
    %v736 = vsel %vm732, %v716, %v719
    %v737 = vsel %vm735, %v725, 2102212464
    %v738 = vsel %vm734, %v722, %v737
    %v739 = vsel %vm733, %v736, %v738
    %v740 = vsel %vm732, %v719, %v722
    %v741 = vsel %vm735, %v728, 920167782
    %v742 = vsel %vm734, %v725, %v741
    %v743 = vsel %vm733, %v740, %v742
    %v744 = vsel %vm732, %v722, %v725
    %v745 = vsel %vm735, %v731, 1326507024
    %v746 = vsel %vm734, %v728, %v745
    %v747 = vsel %vm733, %v744, %v746
    %v748 = vshll.u32 %v708, 8
    %v749 = vmul.u32.u64.compose %v748, %v747
    %v750 = vextract.low.u32 %v749
    %v751 = vextract.high.u32 %v749
    %v752 = vmul.u32.u64.compose %v748, %v743
    %v753 = vextract.low.u32 %v752
    %v754 = vextract.high.u32 %v752
    %v755 = vmul.u32 %v748, %v739
    %v756 = vadd.s32 %v751, %v753
    %vm757 = vc.u32 %v751, %v753
    %v758 = vadd.s32 %v754, 1
    %v759 = vsel %vm757, %v758, %v754
    %v760 = vadd.s32 %v755, %v759
    %v761 = vadd.s32 %v760, 536870912
    %v762 = vshrl.u32 %v761, 30
    %v763 = vshll.u32 %v762, 30
    %v764 = vsub.s32 %v760, %v763
    %vm765 = vcmp.lt.s32.totalorder %v764, 0
    %v766 = vsub.s32 0, %v764
    %v767 = vsel %vm765, %v766, %v764
    %v768 = vclz %v767
    %v769 = vsub.s32 %v768, 2
    %vm770 = vcmp.gt.s32.totalorder 0, %v769
    %v771 = vsel %vm770, 0, %v769
    %v772 = vsub.s32 32, %v771
    %v773 = vshll.u32 %v764, %v771
    %v774 = vshrl.u32 %v756, %v772
    %v775 = vor.u32 %v773, %v774
    %v776 = vsub.s32 4294967266, %v771
    %v777 = vadd.s32 %v776, 127
    %v778 = vshll.u32 %v777, 23
    %v779 = vor.u32 4788187, %v778
    %v780 = vand.u32 2147483647, %v779
    %v782 = vcvt.s32.f32 %v775
    %v783 = vmul.f32 %v782, %v780
    %v784 = vxor.u32 %v783, 2147483648
    %v785 = vsel %vm702, %v784, %v783
    %v786 = vsub.s32 4, %v762
    %v787 = vsel %vm702, %v786, %v762
    %v788 = vsel %vm701, %v699, %v785
    %v789 = vsel %vm701, 0, %v787
    %v790 = vcosq.f32.pop %v788
    %v791 = vsinq.f32.pop %v788
    %vm792 = vweird.f32 %v699
    %v793 = vadd.s32 %v789, 3
    %v794 = vand.u32 %v793, 3
    %vm795 = vcmp.lt.s32.totalorder %v794, 2
    %vm796 = vcmp.eq.s32.totalorder %v794, 0
    %v797 = vxor.u32 %v791, 2147483648
    %v798 = vsel %vm796, %v790, %v797
    %vm799 = vcmp.eq.s32.totalorder %v794, 2
    %v800 = vxor.u32 %v790, 2147483648
    %v801 = vsel %vm799, %v800, %v791
    %v802 = vsel %vm795, %v798, %v801
    %v803 = vsel %vm792, nan, %v802
    %v805 = vcombine.high %v803, %v803
    %v806 = vrot.slane %v803, 3
    %v807 = vrot.slane %v805, 3
    %810 = vst [vmem:[#allocation5 + $0x20] sm:$0xe0] %v806
    %811 = vst [vmem:[#allocation5 + $0x28] sm:$0xe0] %v807
    %v812 = vand.u32 2147483647, %v699
    %vm813 = vcmp.le.f32.partialorder %v812, 0.7853982
    %vm814 = vcmp.lt.s32.totalorder %v699, 0
    %v815 = vand.u32 %v699, 2139095040
    %v816 = vshrl.u32 %v815, 23
    %v817 = vsub.s32 %v816, 127
    %v818 = vand.u32 2147483647, %v699
    %v819 = vand.u32 %v818, 8388607
    %v820 = vor.u32 %v819, 8388608
    %v821 = vsub.s32 0, %v820
    %v822 = vadd.s32 %v817, 1
    %vm823 = vcmp.gt.s32.totalorder %v822, 0
    %v824 = vsel %vm823, %v822, 0
    %v825 = vshrl.u32 %v824, 5
    %v826 = vand.u32 %v824, 31
    %v827 = vsub.s32 32, %v826
    %v828 = vshrl.u32 683565275, %v827
    %v829 = vshll.u32 683565275, %v826
    %v830 = vshrl.u32 2475754826, %v827
    %v831 = vor.u32 %v829, %v830
    %v832 = vshll.u32 2475754826, %v826
    %v833 = vshrl.u32 2131351028, %v827
    %v834 = vor.u32 %v832, %v833
    %v835 = vshll.u32 2131351028, %v826
    %v836 = vshrl.u32 2102212464, %v827
    %v837 = vor.u32 %v835, %v836
    %v838 = vshll.u32 2102212464, %v826
    %v839 = vshrl.u32 920167782, %v827
    %v840 = vor.u32 %v838, %v839
    %v841 = vshll.u32 920167782, %v826
    %v842 = vshrl.u32 1326507024, %v827
    %v843 = vor.u32 %v841, %v842
    %vm844 = vcmp.lt.s32.totalorder %v825, 1
    %vm845 = vcmp.lt.s32.totalorder %v825, 2
    %vm846 = vcmp.lt.s32.totalorder %v825, 3
    %vm847 = vcmp.lt.s32.totalorder %v825, 4
    %v848 = vsel %vm844, %v828, %v831
    %v849 = vsel %vm847, %v837, 2102212464
    %v850 = vsel %vm846, %v834, %v849
    %v851 = vsel %vm845, %v848, %v850
    %v852 = vsel %vm844, %v831, %v834
    %v853 = vsel %vm847, %v840, 920167782
    %v854 = vsel %vm846, %v837, %v853
    %v855 = vsel %vm845, %v852, %v854
    %v856 = vsel %vm844, %v834, %v837
    %v857 = vsel %vm847, %v843, 1326507024
    %v858 = vsel %vm846, %v840, %v857
    %v859 = vsel %vm845, %v856, %v858
    %v860 = vshll.u32 %v820, 8
    %v861 = vmul.u32.u64.compose %v860, %v859
    %v862 = vextract.low.u32 %v861
    %v863 = vextract.high.u32 %v861
    %v864 = vmul.u32.u64.compose %v860, %v855
    %v865 = vextract.low.u32 %v864
    %v866 = vextract.high.u32 %v864
    %v867 = vmul.u32 %v860, %v851
    %v868 = vadd.s32 %v863, %v865
    %vm869 = vc.u32 %v863, %v865
    %v870 = vadd.s32 %v866, 1
    %v871 = vsel %vm869, %v870, %v866
    %v872 = vadd.s32 %v867, %v871
    %v873 = vadd.s32 %v872, 536870912
    %v874 = vshrl.u32 %v873, 30
    %v875 = vshll.u32 %v874, 30
    %v876 = vsub.s32 %v872, %v875
    %vm877 = vcmp.lt.s32.totalorder %v876, 0
    %v878 = vsub.s32 0, %v876
    %v879 = vsel %vm877, %v878, %v876
    %v880 = vclz %v879
    %v881 = vsub.s32 %v880, 2
    %vm882 = vcmp.gt.s32.totalorder 0, %v881
    %v883 = vsel %vm882, 0, %v881
    %v884 = vsub.s32 32, %v883
    %v885 = vshll.u32 %v876, %v883
    %v886 = vshrl.u32 %v868, %v884
    %v887 = vor.u32 %v885, %v886
    %v888 = vsub.s32 4294967266, %v883
    %v889 = vadd.s32 %v888, 127
    %v890 = vshll.u32 %v889, 23
    %v891 = vor.u32 4788187, %v890
    %v892 = vand.u32 2147483647, %v891
    %v894 = vcvt.s32.f32 %v887
    %v895 = vmul.f32 %v894, %v892
    %v896 = vxor.u32 %v895, 2147483648
    %v897 = vsel %vm814, %v896, %v895
    %v898 = vsub.s32 4, %v874
    %v899 = vsel %vm814, %v898, %v874
    %v900 = vsel %vm813, %v699, %v897
    %v901 = vsel %vm813, 0, %v899
    %v902 = vcosq.f32.pop %v900
    %v903 = vsinq.f32.pop %v900
    %vm904 = vweird.f32 %v699
    %v905 = vand.u32 %v901, 3
    %vm906 = vcmp.lt.s32.totalorder %v905, 2
    %vm907 = vcmp.eq.s32.totalorder %v905, 0
    %v908 = vxor.u32 %v903, 2147483648
    %v909 = vsel %vm907, %v902, %v908
    %vm910 = vcmp.eq.s32.totalorder %v905, 2
    %v911 = vxor.u32 %v902, 2147483648
    %v912 = vsel %vm910, %v911, %v903
    %v913 = vsel %vm906, %v909, %v912
    %v914 = vsel %vm904, nan, %v913
    %v916 = vcombine.high %v914, %v914
    %918 = vst [vmem:[#allocation5 + $0x30] sm:$0x7] %v914
    %919 = vst [vmem:[#allocation5 + $0x38] sm:$0x7] %v916
    %v920 = vmul.f32 %v21, 228.11111
    %v921 = vand.u32 2147483647, %v920
    %vm922 = vcmp.le.f32.partialorder %v921, 0.7853982
    %vm923 = vcmp.lt.s32.totalorder %v920, 0
    %v924 = vand.u32 %v920, 2139095040
    %v925 = vshrl.u32 %v924, 23
    %v926 = vsub.s32 %v925, 127
    %v927 = vand.u32 2147483647, %v920
    %v928 = vand.u32 %v927, 8388607
    %v929 = vor.u32 %v928, 8388608
    %v930 = vsub.s32 0, %v929
    %v931 = vadd.s32 %v926, 1
    %vm932 = vcmp.gt.s32.totalorder %v931, 0
    %v933 = vsel %vm932, %v931, 0
    %v934 = vshrl.u32 %v933, 5
    %v935 = vand.u32 %v933, 31
    %v936 = vsub.s32 32, %v935
    %v937 = vshrl.u32 683565275, %v936
    %v938 = vshll.u32 683565275, %v935
    %v939 = vshrl.u32 2475754826, %v936
    %v940 = vor.u32 %v938, %v939
    %v941 = vshll.u32 2475754826, %v935
    %v942 = vshrl.u32 2131351028, %v936
    %v943 = vor.u32 %v941, %v942
    %v944 = vshll.u32 2131351028, %v935
    %v945 = vshrl.u32 2102212464, %v936
    %v946 = vor.u32 %v944, %v945
    %v947 = vshll.u32 2102212464, %v935
    %v948 = vshrl.u32 920167782, %v936
    %v949 = vor.u32 %v947, %v948
    %v950 = vshll.u32 920167782, %v935
    %v951 = vshrl.u32 1326507024, %v936
    %v952 = vor.u32 %v950, %v951
    %vm953 = vcmp.lt.s32.totalorder %v934, 1
    %vm954 = vcmp.lt.s32.totalorder %v934, 2
    %vm955 = vcmp.lt.s32.totalorder %v934, 3
    %vm956 = vcmp.lt.s32.totalorder %v934, 4
    %v957 = vsel %vm953, %v937, %v940
    %v958 = vsel %vm956, %v946, 2102212464
    %v959 = vsel %vm955, %v943, %v958
    %v960 = vsel %vm954, %v957, %v959
    %v961 = vsel %vm953, %v940, %v943
    %v962 = vsel %vm956, %v949, 920167782
    %v963 = vsel %vm955, %v946, %v962
    %v964 = vsel %vm954, %v961, %v963
    %v965 = vsel %vm953, %v943, %v946
    %v966 = vsel %vm956, %v952, 1326507024
    %v967 = vsel %vm955, %v949, %v966
    %v968 = vsel %vm954, %v965, %v967
    %v969 = vshll.u32 %v929, 8
    %v970 = vmul.u32.u64.compose %v969, %v968
    %v971 = vextract.low.u32 %v970
    %v972 = vextract.high.u32 %v970
    %v973 = vmul.u32.u64.compose %v969, %v964
    %v974 = vextract.low.u32 %v973
    %v975 = vextract.high.u32 %v973
    %v976 = vmul.u32 %v969, %v960
    %v977 = vadd.s32 %v972, %v974
    %vm978 = vc.u32 %v972, %v974
    %v979 = vadd.s32 %v975, 1
    %v980 = vsel %vm978, %v979, %v975
    %v981 = vadd.s32 %v976, %v980
    %v982 = vadd.s32 %v981, 536870912
    %v983 = vshrl.u32 %v982, 30
    %v984 = vshll.u32 %v983, 30
    %v985 = vsub.s32 %v981, %v984
    %vm986 = vcmp.lt.s32.totalorder %v985, 0
    %v987 = vsub.s32 0, %v985
    %v988 = vsel %vm986, %v987, %v985
    %v989 = vclz %v988
    %v990 = vsub.s32 %v989, 2
    %vm991 = vcmp.gt.s32.totalorder 0, %v990
    %v992 = vsel %vm991, 0, %v990
    %v993 = vsub.s32 32, %v992
    %v994 = vshll.u32 %v985, %v992
    %v995 = vshrl.u32 %v977, %v993
    %v996 = vor.u32 %v994, %v995
    %v997 = vsub.s32 4294967266, %v992
    %v998 = vadd.s32 %v997, 127
    %v999 = vshll.u32 %v998, 23
    %v1000 = vor.u32 4788187, %v999
    %v1001 = vand.u32 2147483647, %v1000
    %v1003 = vcvt.s32.f32 %v996
    %v1004 = vmul.f32 %v1003, %v1001
    %v1005 = vxor.u32 %v1004, 2147483648
    %v1006 = vsel %vm923, %v1005, %v1004
    %v1007 = vsub.s32 4, %v983
    %v1008 = vsel %vm923, %v1007, %v983
    %v1009 = vsel %vm922, %v920, %v1006
    %v1010 = vsel %vm922, 0, %v1008
    %v1011 = vcosq.f32.pop %v1009
    %v1012 = vsinq.f32.pop %v1009
    %vm1013 = vweird.f32 %v920
    %v1014 = vadd.s32 %v1010, 3
    %v1015 = vand.u32 %v1014, 3
    %vm1016 = vcmp.lt.s32.totalorder %v1015, 2
    %vm1017 = vcmp.eq.s32.totalorder %v1015, 0
    %v1018 = vxor.u32 %v1012, 2147483648
    %v1019 = vsel %vm1017, %v1011, %v1018
    %vm1020 = vcmp.eq.s32.totalorder %v1015, 2
    %v1021 = vxor.u32 %v1011, 2147483648
    %v1022 = vsel %vm1020, %v1021, %v1012
    %v1023 = vsel %vm1016, %v1019, %v1022
    %v1024 = vsel %vm1013, nan, %v1023
    %v1026 = vcombine.high %v1024, %v1024
    %v1027 = vrot.slane %v1024, 5
    %v1028 = vrot.slane %v1026, 5
    %1031 = vst [vmem:[#allocation5 + $0x30] sm:$0x38] %v1027
    %1032 = vst [vmem:[#allocation5 + $0x38] sm:$0x38] %v1028
    %v1033 = vand.u32 2147483647, %v920
    %vm1034 = vcmp.le.f32.partialorder %v1033, 0.7853982
    %vm1035 = vcmp.lt.s32.totalorder %v920, 0
    %v1036 = vand.u32 %v920, 2139095040
    %v1037 = vshrl.u32 %v1036, 23
    %v1038 = vsub.s32 %v1037, 127
    %v1039 = vand.u32 2147483647, %v920
    %v1040 = vand.u32 %v1039, 8388607
    %v1041 = vor.u32 %v1040, 8388608
    %v1042 = vsub.s32 0, %v1041
    %v1043 = vadd.s32 %v1038, 1
    %vm1044 = vcmp.gt.s32.totalorder %v1043, 0
    %v1045 = vsel %vm1044, %v1043, 0
    %v1046 = vshrl.u32 %v1045, 5
    %v1047 = vand.u32 %v1045, 31
    %v1048 = vsub.s32 32, %v1047
    %v1049 = vshrl.u32 683565275, %v1048
    %v1050 = vshll.u32 683565275, %v1047
    %v1051 = vshrl.u32 2475754826, %v1048
    %v1052 = vor.u32 %v1050, %v1051
    %v1053 = vshll.u32 2475754826, %v1047
    %v1054 = vshrl.u32 2131351028, %v1048
    %v1055 = vor.u32 %v1053, %v1054
    %v1056 = vshll.u32 2131351028, %v1047
    %v1057 = vshrl.u32 2102212464, %v1048
    %v1058 = vor.u32 %v1056, %v1057
    %v1059 = vshll.u32 2102212464, %v1047
    %v1060 = vshrl.u32 920167782, %v1048
    %v1061 = vor.u32 %v1059, %v1060
    %v1062 = vshll.u32 920167782, %v1047
    %v1063 = vshrl.u32 1326507024, %v1048
    %v1064 = vor.u32 %v1062, %v1063
    %vm1065 = vcmp.lt.s32.totalorder %v1046, 1
    %vm1066 = vcmp.lt.s32.totalorder %v1046, 2
    %vm1067 = vcmp.lt.s32.totalorder %v1046, 3
    %vm1068 = vcmp.lt.s32.totalorder %v1046, 4
    %v1069 = vsel %vm1065, %v1049, %v1052
    %v1070 = vsel %vm1068, %v1058, 2102212464
    %v1071 = vsel %vm1067, %v1055, %v1070
    %v1072 = vsel %vm1066, %v1069, %v1071
    %v1073 = vsel %vm1065, %v1052, %v1055
    %v1074 = vsel %vm1068, %v1061, 920167782
    %v1075 = vsel %vm1067, %v1058, %v1074
    %v1076 = vsel %vm1066, %v1073, %v1075
    %v1077 = vsel %vm1065, %v1055, %v1058
    %v1078 = vsel %vm1068, %v1064, 1326507024
    %v1079 = vsel %vm1067, %v1061, %v1078
    %v1080 = vsel %vm1066, %v1077, %v1079
    %v1081 = vshll.u32 %v1041, 8
    %v1082 = vmul.u32.u64.compose %v1081, %v1080
    %v1083 = vextract.low.u32 %v1082
    %v1084 = vextract.high.u32 %v1082
    %v1085 = vmul.u32.u64.compose %v1081, %v1076
    %v1086 = vextract.low.u32 %v1085
    %v1087 = vextract.high.u32 %v1085
    %v1088 = vmul.u32 %v1081, %v1072
    %v1089 = vadd.s32 %v1084, %v1086
    %vm1090 = vc.u32 %v1084, %v1086
    %v1091 = vadd.s32 %v1087, 1
    %v1092 = vsel %vm1090, %v1091, %v1087
    %v1093 = vadd.s32 %v1088, %v1092
    %v1094 = vadd.s32 %v1093, 536870912
    %v1095 = vshrl.u32 %v1094, 30
    %v1096 = vshll.u32 %v1095, 30
    %v1097 = vsub.s32 %v1093, %v1096
    %vm1098 = vcmp.lt.s32.totalorder %v1097, 0
    %v1099 = vsub.s32 0, %v1097
    %v1100 = vsel %vm1098, %v1099, %v1097
    %v1101 = vclz %v1100
    %v1102 = vsub.s32 %v1101, 2
    %vm1103 = vcmp.gt.s32.totalorder 0, %v1102
    %v1104 = vsel %vm1103, 0, %v1102
    %v1105 = vsub.s32 32, %v1104
    %v1106 = vshll.u32 %v1097, %v1104
    %v1107 = vshrl.u32 %v1089, %v1105
    %v1108 = vor.u32 %v1106, %v1107
    %v1109 = vsub.s32 4294967266, %v1104
    %v1110 = vadd.s32 %v1109, 127
    %v1111 = vshll.u32 %v1110, 23
    %v1112 = vor.u32 4788187, %v1111
    %v1113 = vand.u32 2147483647, %v1112
    %v1115 = vcvt.s32.f32 %v1108
    %v1116 = vmul.f32 %v1115, %v1113
    %v1117 = vxor.u32 %v1116, 2147483648
    %v1118 = vsel %vm1035, %v1117, %v1116
    %v1119 = vsub.s32 4, %v1095
    %v1120 = vsel %vm1035, %v1119, %v1095
    %v1121 = vsel %vm1034, %v920, %v1118
    %v1122 = vsel %vm1034, 0, %v1120
    %v1123 = vcosq.f32.pop %v1121
    %v1124 = vsinq.f32.pop %v1121
    %vm1125 = vweird.f32 %v920
    %v1126 = vand.u32 %v1122, 3
    %vm1127 = vcmp.lt.s32.totalorder %v1126, 2
    %vm1128 = vcmp.eq.s32.totalorder %v1126, 0
    %v1129 = vxor.u32 %v1124, 2147483648
    %v1130 = vsel %vm1128, %v1123, %v1129
    %vm1131 = vcmp.eq.s32.totalorder %v1126, 2
    %v1132 = vxor.u32 %v1123, 2147483648
    %v1133 = vsel %vm1131, %v1132, %v1124
    %v1134 = vsel %vm1127, %v1130, %v1133
    %v1135 = vsel %vm1125, nan, %v1134
    %v1137 = vcombine.high %v1135, %v1135
    %v1138 = vrot.slane %v1135, 2
    %v1139 = vrot.slane %v1137, 2
    %1142 = vst [vmem:[#allocation5 + $0x30] sm:$0xc0] %v1138
    %1143 = vst [vmem:[#allocation5 + $0x38] sm:$0xc0] %v1139
    %1144 = vst [vmem:[#allocation5 + $0x40] sm:$0x1] %v1138
    %1145 = vst [vmem:[#allocation5 + $0x48] sm:$0x1] %v1139
    %v1146 = vmul.f32 %v21, 284.8889
    %v1147 = vand.u32 2147483647, %v1146
    %vm1148 = vcmp.le.f32.partialorder %v1147, 0.7853982
    %vm1149 = vcmp.lt.s32.totalorder %v1146, 0
    %v1150 = vand.u32 %v1146, 2139095040
    %v1151 = vshrl.u32 %v1150, 23
    %v1152 = vsub.s32 %v1151, 127
    %v1153 = vand.u32 2147483647, %v1146
    %v1154 = vand.u32 %v1153, 8388607
    %v1155 = vor.u32 %v1154, 8388608
    %v1156 = vsub.s32 0, %v1155
    %v1157 = vadd.s32 %v1152, 1
    %vm1158 = vcmp.gt.s32.totalorder %v1157, 0
    %v1159 = vsel %vm1158, %v1157, 0
    %v1160 = vshrl.u32 %v1159, 5
    %v1161 = vand.u32 %v1159, 31
    %v1162 = vsub.s32 32, %v1161
    %v1163 = vshrl.u32 683565275, %v1162
    %v1164 = vshll.u32 683565275, %v1161
    %v1165 = vshrl.u32 2475754826, %v1162
    %v1166 = vor.u32 %v1164, %v1165
    %v1167 = vshll.u32 2475754826, %v1161
    %v1168 = vshrl.u32 2131351028, %v1162
    %v1169 = vor.u32 %v1167, %v1168
    %v1170 = vshll.u32 2131351028, %v1161
    %v1171 = vshrl.u32 2102212464, %v1162
    %v1172 = vor.u32 %v1170, %v1171
    %v1173 = vshll.u32 2102212464, %v1161
    %v1174 = vshrl.u32 920167782, %v1162
    %v1175 = vor.u32 %v1173, %v1174
    %v1176 = vshll.u32 920167782, %v1161
    %v1177 = vshrl.u32 1326507024, %v1162
    %v1178 = vor.u32 %v1176, %v1177
    %vm1179 = vcmp.lt.s32.totalorder %v1160, 1
    %vm1180 = vcmp.lt.s32.totalorder %v1160, 2
    %vm1181 = vcmp.lt.s32.totalorder %v1160, 3
    %vm1182 = vcmp.lt.s32.totalorder %v1160, 4
    %v1183 = vsel %vm1179, %v1163, %v1166
    %v1184 = vsel %vm1182, %v1172, 2102212464
    %v1185 = vsel %vm1181, %v1169, %v1184
    %v1186 = vsel %vm1180, %v1183, %v1185
    %v1187 = vsel %vm1179, %v1166, %v1169
    %v1188 = vsel %vm1182, %v1175, 920167782
    %v1189 = vsel %vm1181, %v1172, %v1188
    %v1190 = vsel %vm1180, %v1187, %v1189
    %v1191 = vsel %vm1179, %v1169, %v1172
    %v1192 = vsel %vm1182, %v1178, 1326507024
    %v1193 = vsel %vm1181, %v1175, %v1192
    %v1194 = vsel %vm1180, %v1191, %v1193
    %v1195 = vshll.u32 %v1155, 8
    %v1196 = vmul.u32.u64.compose %v1195, %v1194
    %v1197 = vextract.low.u32 %v1196
    %v1198 = vextract.high.u32 %v1196
    %v1199 = vmul.u32.u64.compose %v1195, %v1190
    %v1200 = vextract.low.u32 %v1199
    %v1201 = vextract.high.u32 %v1199
    %v1202 = vmul.u32 %v1195, %v1186
    %v1203 = vadd.s32 %v1198, %v1200
    %vm1204 = vc.u32 %v1198, %v1200
    %v1205 = vadd.s32 %v1201, 1
    %v1206 = vsel %vm1204, %v1205, %v1201
    %v1207 = vadd.s32 %v1202, %v1206
    %v1208 = vadd.s32 %v1207, 536870912
    %v1209 = vshrl.u32 %v1208, 30
    %v1210 = vshll.u32 %v1209, 30
    %v1211 = vsub.s32 %v1207, %v1210
    %vm1212 = vcmp.lt.s32.totalorder %v1211, 0
    %v1213 = vsub.s32 0, %v1211
    %v1214 = vsel %vm1212, %v1213, %v1211
    %v1215 = vclz %v1214
    %v1216 = vsub.s32 %v1215, 2
    %vm1217 = vcmp.gt.s32.totalorder 0, %v1216
    %v1218 = vsel %vm1217, 0, %v1216
    %v1219 = vsub.s32 32, %v1218
    %v1220 = vshll.u32 %v1211, %v1218
    %v1221 = vshrl.u32 %v1203, %v1219
    %v1222 = vor.u32 %v1220, %v1221
    %v1223 = vsub.s32 4294967266, %v1218
    %v1224 = vadd.s32 %v1223, 127
    %v1225 = vshll.u32 %v1224, 23
    %v1226 = vor.u32 4788187, %v1225
    %v1227 = vand.u32 2147483647, %v1226
    %v1229 = vcvt.s32.f32 %v1222
    %v1230 = vmul.f32 %v1229, %v1227
    %v1231 = vxor.u32 %v1230, 2147483648
    %v1232 = vsel %vm1149, %v1231, %v1230
    %v1233 = vsub.s32 4, %v1209
    %v1234 = vsel %vm1149, %v1233, %v1209
    %v1235 = vsel %vm1148, %v1146, %v1232
    %v1236 = vsel %vm1148, 0, %v1234
    %v1237 = vcosq.f32.pop %v1235
    %v1238 = vsinq.f32.pop %v1235
    %vm1239 = vweird.f32 %v1146
    %v1240 = vadd.s32 %v1236, 3
    %v1241 = vand.u32 %v1240, 3
    %vm1242 = vcmp.lt.s32.totalorder %v1241, 2
    %vm1243 = vcmp.eq.s32.totalorder %v1241, 0
    %v1244 = vxor.u32 %v1238, 2147483648
    %v1245 = vsel %vm1243, %v1237, %v1244
    %vm1246 = vcmp.eq.s32.totalorder %v1241, 2
    %v1247 = vxor.u32 %v1237, 2147483648
    %v1248 = vsel %vm1246, %v1247, %v1238
    %v1249 = vsel %vm1242, %v1245, %v1248
    %v1250 = vsel %vm1239, nan, %v1249
    %v1252 = vcombine.high %v1250, %v1250
    %v1253 = vrot.slane %v1250, 7
    %v1254 = vrot.slane %v1252, 7
    %1257 = vst [vmem:[#allocation5 + $0x40] sm:$0xe] %v1253
    %1258 = vst [vmem:[#allocation5 + $0x48] sm:$0xe] %v1254
    %v1259 = vand.u32 2147483647, %v1146
    %vm1260 = vcmp.le.f32.partialorder %v1259, 0.7853982
    %vm1261 = vcmp.lt.s32.totalorder %v1146, 0
    %v1262 = vand.u32 %v1146, 2139095040
    %v1263 = vshrl.u32 %v1262, 23
    %v1264 = vsub.s32 %v1263, 127
    %v1265 = vand.u32 2147483647, %v1146
    %v1266 = vand.u32 %v1265, 8388607
    %v1267 = vor.u32 %v1266, 8388608
    %v1268 = vsub.s32 0, %v1267
    %v1269 = vadd.s32 %v1264, 1
    %vm1270 = vcmp.gt.s32.totalorder %v1269, 0
    %v1271 = vsel %vm1270, %v1269, 0
    %v1272 = vshrl.u32 %v1271, 5
    %v1273 = vand.u32 %v1271, 31
    %v1274 = vsub.s32 32, %v1273
    %v1275 = vshrl.u32 683565275, %v1274
    %v1276 = vshll.u32 683565275, %v1273
    %v1277 = vshrl.u32 2475754826, %v1274
    %v1278 = vor.u32 %v1276, %v1277
    %v1279 = vshll.u32 2475754826, %v1273
    %v1280 = vshrl.u32 2131351028, %v1274
    %v1281 = vor.u32 %v1279, %v1280
    %v1282 = vshll.u32 2131351028, %v1273
    %v1283 = vshrl.u32 2102212464, %v1274
    %v1284 = vor.u32 %v1282, %v1283
    %v1285 = vshll.u32 2102212464, %v1273
    %v1286 = vshrl.u32 920167782, %v1274
    %v1287 = vor.u32 %v1285, %v1286
    %v1288 = vshll.u32 920167782, %v1273
    %v1289 = vshrl.u32 1326507024, %v1274
    %v1290 = vor.u32 %v1288, %v1289
    %vm1291 = vcmp.lt.s32.totalorder %v1272, 1
    %vm1292 = vcmp.lt.s32.totalorder %v1272, 2
    %vm1293 = vcmp.lt.s32.totalorder %v1272, 3
    %vm1294 = vcmp.lt.s32.totalorder %v1272, 4
    %v1295 = vsel %vm1291, %v1275, %v1278
    %v1296 = vsel %vm1294, %v1284, 2102212464
    %v1297 = vsel %vm1293, %v1281, %v1296
    %v1298 = vsel %vm1292, %v1295, %v1297
    %v1299 = vsel %vm1291, %v1278, %v1281
    %v1300 = vsel %vm1294, %v1287, 920167782
    %v1301 = vsel %vm1293, %v1284, %v1300
    %v1302 = vsel %vm1292, %v1299, %v1301
    %v1303 = vsel %vm1291, %v1281, %v1284
    %v1304 = vsel %vm1294, %v1290, 1326507024
    %v1305 = vsel %vm1293, %v1287, %v1304
    %v1306 = vsel %vm1292, %v1303, %v1305
    %v1307 = vshll.u32 %v1267, 8
    %v1308 = vmul.u32.u64.compose %v1307, %v1306
    %v1309 = vextract.low.u32 %v1308
    %v1310 = vextract.high.u32 %v1308
    %v1311 = vmul.u32.u64.compose %v1307, %v1302
    %v1312 = vextract.low.u32 %v1311
    %v1313 = vextract.high.u32 %v1311
    %v1314 = vmul.u32 %v1307, %v1298
    %v1315 = vadd.s32 %v1310, %v1312
    %vm1316 = vc.u32 %v1310, %v1312
    %v1317 = vadd.s32 %v1313, 1
    %v1318 = vsel %vm1316, %v1317, %v1313
    %v1319 = vadd.s32 %v1314, %v1318
    %v1320 = vadd.s32 %v1319, 536870912
    %v1321 = vshrl.u32 %v1320, 30
    %v1322 = vshll.u32 %v1321, 30
    %v1323 = vsub.s32 %v1319, %v1322
    %vm1324 = vcmp.lt.s32.totalorder %v1323, 0
    %v1325 = vsub.s32 0, %v1323
    %v1326 = vsel %vm1324, %v1325, %v1323
    %v1327 = vclz %v1326
    %v1328 = vsub.s32 %v1327, 2
    %vm1329 = vcmp.gt.s32.totalorder 0, %v1328
    %v1330 = vsel %vm1329, 0, %v1328
    %v1331 = vsub.s32 32, %v1330
    %v1332 = vshll.u32 %v1323, %v1330
    %v1333 = vshrl.u32 %v1315, %v1331
    %v1334 = vor.u32 %v1332, %v1333
    %v1335 = vsub.s32 4294967266, %v1330
    %v1336 = vadd.s32 %v1335, 127
    %v1337 = vshll.u32 %v1336, 23
    %v1338 = vor.u32 4788187, %v1337
    %v1339 = vand.u32 2147483647, %v1338
    %v1341 = vcvt.s32.f32 %v1334
    %v1342 = vmul.f32 %v1341, %v1339
    %v1343 = vxor.u32 %v1342, 2147483648
    %v1344 = vsel %vm1261, %v1343, %v1342
    %v1345 = vsub.s32 4, %v1321
    %v1346 = vsel %vm1261, %v1345, %v1321
    %v1347 = vsel %vm1260, %v1146, %v1344
    %v1348 = vsel %vm1260, 0, %v1346
    %v1349 = vcosq.f32.pop %v1347
    %v1350 = vsinq.f32.pop %v1347
    %vm1351 = vweird.f32 %v1146
    %v1352 = vand.u32 %v1348, 3
    %vm1353 = vcmp.lt.s32.totalorder %v1352, 2
    %vm1354 = vcmp.eq.s32.totalorder %v1352, 0
    %v1355 = vxor.u32 %v1350, 2147483648
    %v1356 = vsel %vm1354, %v1349, %v1355
    %vm1357 = vcmp.eq.s32.totalorder %v1352, 2
    %v1358 = vxor.u32 %v1349, 2147483648
    %v1359 = vsel %vm1357, %v1358, %v1350
    %v1360 = vsel %vm1353, %v1356, %v1359
    %v1361 = vsel %vm1351, nan, %v1360
    %v1363 = vcombine.low %v1361, %v1361
    %1365 = vst [vmem:[#allocation5 + $0x40] sm:$0x70] %v1363
    %1366 = vst [vmem:[#allocation5 + $0x48] sm:$0x70] %v1361
    %v1367 = vmul.f32 %v21, 341.66666
    %v1368 = vand.u32 2147483647, %v1367
    %vm1369 = vcmp.le.f32.partialorder %v1368, 0.7853982
    %vm1370 = vcmp.lt.s32.totalorder %v1367, 0
    %v1371 = vand.u32 %v1367, 2139095040
    %v1372 = vshrl.u32 %v1371, 23
    %v1373 = vsub.s32 %v1372, 127
    %v1374 = vand.u32 2147483647, %v1367
    %v1375 = vand.u32 %v1374, 8388607
    %v1376 = vor.u32 %v1375, 8388608
    %v1377 = vsub.s32 0, %v1376
    %v1378 = vadd.s32 %v1373, 1
    %vm1379 = vcmp.gt.s32.totalorder %v1378, 0
    %v1380 = vsel %vm1379, %v1378, 0
    %v1381 = vshrl.u32 %v1380, 5
    %v1382 = vand.u32 %v1380, 31
    %v1383 = vsub.s32 32, %v1382
    %v1384 = vshrl.u32 683565275, %v1383
    %v1385 = vshll.u32 683565275, %v1382
    %v1386 = vshrl.u32 2475754826, %v1383
    %v1387 = vor.u32 %v1385, %v1386
    %v1388 = vshll.u32 2475754826, %v1382
    %v1389 = vshrl.u32 2131351028, %v1383
    %v1390 = vor.u32 %v1388, %v1389
    %v1391 = vshll.u32 2131351028, %v1382
    %v1392 = vshrl.u32 2102212464, %v1383
    %v1393 = vor.u32 %v1391, %v1392
    %v1394 = vshll.u32 2102212464, %v1382
    %v1395 = vshrl.u32 920167782, %v1383
    %v1396 = vor.u32 %v1394, %v1395
    %v1397 = vshll.u32 920167782, %v1382
    %v1398 = vshrl.u32 1326507024, %v1383
    %v1399 = vor.u32 %v1397, %v1398
    %vm1400 = vcmp.lt.s32.totalorder %v1381, 1
    %vm1401 = vcmp.lt.s32.totalorder %v1381, 2
    %vm1402 = vcmp.lt.s32.totalorder %v1381, 3
    %vm1403 = vcmp.lt.s32.totalorder %v1381, 4
    %v1404 = vsel %vm1400, %v1384, %v1387
    %v1405 = vsel %vm1403, %v1393, 2102212464
    %v1406 = vsel %vm1402, %v1390, %v1405
    %v1407 = vsel %vm1401, %v1404, %v1406
    %v1408 = vsel %vm1400, %v1387, %v1390
    %v1409 = vsel %vm1403, %v1396, 920167782
    %v1410 = vsel %vm1402, %v1393, %v1409
    %v1411 = vsel %vm1401, %v1408, %v1410
    %v1412 = vsel %vm1400, %v1390, %v1393
    %v1413 = vsel %vm1403, %v1399, 1326507024
    %v1414 = vsel %vm1402, %v1396, %v1413
    %v1415 = vsel %vm1401, %v1412, %v1414
    %v1416 = vshll.u32 %v1376, 8
    %v1417 = vmul.u32.u64.compose %v1416, %v1415
    %v1418 = vextract.low.u32 %v1417
    %v1419 = vextract.high.u32 %v1417
    %v1420 = vmul.u32.u64.compose %v1416, %v1411
    %v1421 = vextract.low.u32 %v1420
    %v1422 = vextract.high.u32 %v1420
    %v1423 = vmul.u32 %v1416, %v1407
    %v1424 = vadd.s32 %v1419, %v1421
    %vm1425 = vc.u32 %v1419, %v1421
    %v1426 = vadd.s32 %v1422, 1
    %v1427 = vsel %vm1425, %v1426, %v1422
    %v1428 = vadd.s32 %v1423, %v1427
    %v1429 = vadd.s32 %v1428, 536870912
    %v1430 = vshrl.u32 %v1429, 30
    %v1431 = vshll.u32 %v1430, 30
    %v1432 = vsub.s32 %v1428, %v1431
    %vm1433 = vcmp.lt.s32.totalorder %v1432, 0
    %v1434 = vsub.s32 0, %v1432
    %v1435 = vsel %vm1433, %v1434, %v1432
    %v1436 = vclz %v1435
    %v1437 = vsub.s32 %v1436, 2
    %vm1438 = vcmp.gt.s32.totalorder 0, %v1437
    %v1439 = vsel %vm1438, 0, %v1437
    %v1440 = vsub.s32 32, %v1439
    %v1441 = vshll.u32 %v1432, %v1439
    %v1442 = vshrl.u32 %v1424, %v1440
    %v1443 = vor.u32 %v1441, %v1442
    %v1444 = vsub.s32 4294967266, %v1439
    %v1445 = vadd.s32 %v1444, 127
    %v1446 = vshll.u32 %v1445, 23
    %v1447 = vor.u32 4788187, %v1446
    %v1448 = vand.u32 2147483647, %v1447
    %v1450 = vcvt.s32.f32 %v1443
    %v1451 = vmul.f32 %v1450, %v1448
    %v1452 = vxor.u32 %v1451, 2147483648
    %v1453 = vsel %vm1370, %v1452, %v1451
    %v1454 = vsub.s32 4, %v1430
    %v1455 = vsel %vm1370, %v1454, %v1430
    %v1456 = vsel %vm1369, %v1367, %v1453
    %v1457 = vsel %vm1369, 0, %v1455
    %v1458 = vcosq.f32.pop %v1456
    %v1459 = vsinq.f32.pop %v1456
    %vm1460 = vweird.f32 %v1367
    %v1461 = vadd.s32 %v1457, 3
    %v1462 = vand.u32 %v1461, 3
    %vm1463 = vcmp.lt.s32.totalorder %v1462, 2
    %vm1464 = vcmp.eq.s32.totalorder %v1462, 0
    %v1465 = vxor.u32 %v1459, 2147483648
    %v1466 = vsel %vm1464, %v1458, %v1465
    %vm1467 = vcmp.eq.s32.totalorder %v1462, 2
    %v1468 = vxor.u32 %v1458, 2147483648
    %v1469 = vsel %vm1467, %v1468, %v1459
    %v1470 = vsel %vm1463, %v1466, %v1469
    %v1471 = vsel %vm1460, nan, %v1470
    %v1473 = vcombine.high %v1471, %v1471
    %v1474 = vrot.slane %v1471, 1
    %v1475 = vrot.slane %v1473, 1
    %1478 = vst [vmem:[#allocation5 + $0x40] sm:$0x80] %v1474
    %1479 = vst [vmem:[#allocation5 + $0x48] sm:$0x80] %v1475
    %1480 = vst [vmem:[#allocation5 + $0x50] sm:$0x3] %v1474
    %1481 = vst [vmem:[#allocation5 + $0x58] sm:$0x3] %v1475
    %v1482 = vand.u32 2147483647, %v1367
    %vm1483 = vcmp.le.f32.partialorder %v1482, 0.7853982
    %vm1484 = vcmp.lt.s32.totalorder %v1367, 0
    %v1485 = vand.u32 %v1367, 2139095040
    %v1486 = vshrl.u32 %v1485, 23
    %v1487 = vsub.s32 %v1486, 127
    %v1488 = vand.u32 2147483647, %v1367
    %v1489 = vand.u32 %v1488, 8388607
    %v1490 = vor.u32 %v1489, 8388608
    %v1491 = vsub.s32 0, %v1490
    %v1492 = vadd.s32 %v1487, 1
    %vm1493 = vcmp.gt.s32.totalorder %v1492, 0
    %v1494 = vsel %vm1493, %v1492, 0
    %v1495 = vshrl.u32 %v1494, 5
    %v1496 = vand.u32 %v1494, 31
    %v1497 = vsub.s32 32, %v1496
    %v1498 = vshrl.u32 683565275, %v1497
    %v1499 = vshll.u32 683565275, %v1496
    %v1500 = vshrl.u32 2475754826, %v1497
    %v1501 = vor.u32 %v1499, %v1500
    %v1502 = vshll.u32 2475754826, %v1496
    %v1503 = vshrl.u32 2131351028, %v1497
    %v1504 = vor.u32 %v1502, %v1503
    %v1505 = vshll.u32 2131351028, %v1496
    %v1506 = vshrl.u32 2102212464, %v1497
    %v1507 = vor.u32 %v1505, %v1506
    %v1508 = vshll.u32 2102212464, %v1496
    %v1509 = vshrl.u32 920167782, %v1497
    %v1510 = vor.u32 %v1508, %v1509
    %v1511 = vshll.u32 920167782, %v1496
    %v1512 = vshrl.u32 1326507024, %v1497
    %v1513 = vor.u32 %v1511, %v1512
    %vm1514 = vcmp.lt.s32.totalorder %v1495, 1
    %vm1515 = vcmp.lt.s32.totalorder %v1495, 2
    %vm1516 = vcmp.lt.s32.totalorder %v1495, 3
    %vm1517 = vcmp.lt.s32.totalorder %v1495, 4
    %v1518 = vsel %vm1514, %v1498, %v1501
    %v1519 = vsel %vm1517, %v1507, 2102212464
    %v1520 = vsel %vm1516, %v1504, %v1519
    %v1521 = vsel %vm1515, %v1518, %v1520
    %v1522 = vsel %vm1514, %v1501, %v1504
    %v1523 = vsel %vm1517, %v1510, 920167782
    %v1524 = vsel %vm1516, %v1507, %v1523
    %v1525 = vsel %vm1515, %v1522, %v1524
    %v1526 = vsel %vm1514, %v1504, %v1507
    %v1527 = vsel %vm1517, %v1513, 1326507024
    %v1528 = vsel %vm1516, %v1510, %v1527
    %v1529 = vsel %vm1515, %v1526, %v1528
    %v1530 = vshll.u32 %v1490, 8
    %v1531 = vmul.u32.u64.compose %v1530, %v1529
    %v1532 = vextract.low.u32 %v1531
    %v1533 = vextract.high.u32 %v1531
    %v1534 = vmul.u32.u64.compose %v1530, %v1525
    %v1535 = vextract.low.u32 %v1534
    %v1536 = vextract.high.u32 %v1534
    %v1537 = vmul.u32 %v1530, %v1521
    %v1538 = vadd.s32 %v1533, %v1535
    %vm1539 = vc.u32 %v1533, %v1535
    %v1540 = vadd.s32 %v1536, 1
    %v1541 = vsel %vm1539, %v1540, %v1536
    %v1542 = vadd.s32 %v1537, %v1541
    %v1543 = vadd.s32 %v1542, 536870912
    %v1544 = vshrl.u32 %v1543, 30
    %v1545 = vshll.u32 %v1544, 30
    %v1546 = vsub.s32 %v1542, %v1545
    %vm1547 = vcmp.lt.s32.totalorder %v1546, 0
    %v1548 = vsub.s32 0, %v1546
    %v1549 = vsel %vm1547, %v1548, %v1546
    %v1550 = vclz %v1549
    %v1551 = vsub.s32 %v1550, 2
    %vm1552 = vcmp.gt.s32.totalorder 0, %v1551
    %v1553 = vsel %vm1552, 0, %v1551
    %v1554 = vsub.s32 32, %v1553
    %v1555 = vshll.u32 %v1546, %v1553
    %v1556 = vshrl.u32 %v1538, %v1554
    %v1557 = vor.u32 %v1555, %v1556
    %v1558 = vsub.s32 4294967266, %v1553
    %v1559 = vadd.s32 %v1558, 127
    %v1560 = vshll.u32 %v1559, 23
    %v1561 = vor.u32 4788187, %v1560
    %v1562 = vand.u32 2147483647, %v1561
    %v1564 = vcvt.s32.f32 %v1557
    %v1565 = vmul.f32 %v1564, %v1562
    %v1566 = vxor.u32 %v1565, 2147483648
    %v1567 = vsel %vm1484, %v1566, %v1565
    %v1568 = vsub.s32 4, %v1544
    %v1569 = vsel %vm1484, %v1568, %v1544
    %v1570 = vsel %vm1483, %v1367, %v1567
    %v1571 = vsel %vm1483, 0, %v1569
    %v1572 = vcosq.f32.pop %v1570
    %v1573 = vsinq.f32.pop %v1570
    %vm1574 = vweird.f32 %v1367
    %v1575 = vand.u32 %v1571, 3
    %vm1576 = vcmp.lt.s32.totalorder %v1575, 2
    %vm1577 = vcmp.eq.s32.totalorder %v1575, 0
    %v1578 = vxor.u32 %v1573, 2147483648
    %v1579 = vsel %vm1577, %v1572, %v1578
    %vm1580 = vcmp.eq.s32.totalorder %v1575, 2
    %v1581 = vxor.u32 %v1572, 2147483648
    %v1582 = vsel %vm1580, %v1581, %v1573
    %v1583 = vsel %vm1576, %v1579, %v1582
    %v1584 = vsel %vm1574, nan, %v1583
    %v1586 = vcombine.high %v1584, %v1584
    %v1587 = vrot.slane %v1584, 6
    %v1588 = vrot.slane %v1586, 6
    %1591 = vst [vmem:[#allocation5 + $0x50] sm:$0x1c] %v1587
    %1592 = vst [vmem:[#allocation5 + $0x58] sm:$0x1c] %v1588
    %v1593 = vmul.f32 %v21, 398.44446
    %v1594 = vand.u32 2147483647, %v1593
    %vm1595 = vcmp.le.f32.partialorder %v1594, 0.7853982
    %vm1596 = vcmp.lt.s32.totalorder %v1593, 0
    %v1597 = vand.u32 %v1593, 2139095040
    %v1598 = vshrl.u32 %v1597, 23
    %v1599 = vsub.s32 %v1598, 127
    %v1600 = vand.u32 2147483647, %v1593
    %v1601 = vand.u32 %v1600, 8388607
    %v1602 = vor.u32 %v1601, 8388608
    %v1603 = vsub.s32 0, %v1602
    %v1604 = vadd.s32 %v1599, 1
    %vm1605 = vcmp.gt.s32.totalorder %v1604, 0
    %v1606 = vsel %vm1605, %v1604, 0
    %v1607 = vshrl.u32 %v1606, 5
    %v1608 = vand.u32 %v1606, 31
    %v1609 = vsub.s32 32, %v1608
    %v1610 = vshrl.u32 683565275, %v1609
    %v1611 = vshll.u32 683565275, %v1608
    %v1612 = vshrl.u32 2475754826, %v1609
    %v1613 = vor.u32 %v1611, %v1612
    %v1614 = vshll.u32 2475754826, %v1608
    %v1615 = vshrl.u32 2131351028, %v1609
    %v1616 = vor.u32 %v1614, %v1615
    %v1617 = vshll.u32 2131351028, %v1608
    %v1618 = vshrl.u32 2102212464, %v1609
    %v1619 = vor.u32 %v1617, %v1618
    %v1620 = vshll.u32 2102212464, %v1608
    %v1621 = vshrl.u32 920167782, %v1609
    %v1622 = vor.u32 %v1620, %v1621
    %v1623 = vshll.u32 920167782, %v1608
    %v1624 = vshrl.u32 1326507024, %v1609
    %v1625 = vor.u32 %v1623, %v1624
    %vm1626 = vcmp.lt.s32.totalorder %v1607, 1
    %vm1627 = vcmp.lt.s32.totalorder %v1607, 2
    %vm1628 = vcmp.lt.s32.totalorder %v1607, 3
    %vm1629 = vcmp.lt.s32.totalorder %v1607, 4
    %v1630 = vsel %vm1626, %v1610, %v1613
    %v1631 = vsel %vm1629, %v1619, 2102212464
    %v1632 = vsel %vm1628, %v1616, %v1631
    %v1633 = vsel %vm1627, %v1630, %v1632
    %v1634 = vsel %vm1626, %v1613, %v1616
    %v1635 = vsel %vm1629, %v1622, 920167782
    %v1636 = vsel %vm1628, %v1619, %v1635
    %v1637 = vsel %vm1627, %v1634, %v1636
    %v1638 = vsel %vm1626, %v1616, %v1619
    %v1639 = vsel %vm1629, %v1625, 1326507024
    %v1640 = vsel %vm1628, %v1622, %v1639
    %v1641 = vsel %vm1627, %v1638, %v1640
    %v1642 = vshll.u32 %v1602, 8
    %v1643 = vmul.u32.u64.compose %v1642, %v1641
    %v1644 = vextract.low.u32 %v1643
    %v1645 = vextract.high.u32 %v1643
    %v1646 = vmul.u32.u64.compose %v1642, %v1637
    %v1647 = vextract.low.u32 %v1646
    %v1648 = vextract.high.u32 %v1646
    %v1649 = vmul.u32 %v1642, %v1633
    %v1650 = vadd.s32 %v1645, %v1647
    %vm1651 = vc.u32 %v1645, %v1647
    %v1652 = vadd.s32 %v1648, 1
    %v1653 = vsel %vm1651, %v1652, %v1648
    %v1654 = vadd.s32 %v1649, %v1653
    %v1655 = vadd.s32 %v1654, 536870912
    %v1656 = vshrl.u32 %v1655, 30
    %v1657 = vshll.u32 %v1656, 30
    %v1658 = vsub.s32 %v1654, %v1657
    %vm1659 = vcmp.lt.s32.totalorder %v1658, 0
    %v1660 = vsub.s32 0, %v1658
    %v1661 = vsel %vm1659, %v1660, %v1658
    %v1662 = vclz %v1661
    %v1663 = vsub.s32 %v1662, 2
    %vm1664 = vcmp.gt.s32.totalorder 0, %v1663
    %v1665 = vsel %vm1664, 0, %v1663
    %v1666 = vsub.s32 32, %v1665
    %v1667 = vshll.u32 %v1658, %v1665
    %v1668 = vshrl.u32 %v1650, %v1666
    %v1669 = vor.u32 %v1667, %v1668
    %v1670 = vsub.s32 4294967266, %v1665
    %v1671 = vadd.s32 %v1670, 127
    %v1672 = vshll.u32 %v1671, 23
    %v1673 = vor.u32 4788187, %v1672
    %v1674 = vand.u32 2147483647, %v1673
    %v1676 = vcvt.s32.f32 %v1669
    %v1677 = vmul.f32 %v1676, %v1674
    %v1678 = vxor.u32 %v1677, 2147483648
    %v1679 = vsel %vm1596, %v1678, %v1677
    %v1680 = vsub.s32 4, %v1656
    %v1681 = vsel %vm1596, %v1680, %v1656
    %v1682 = vsel %vm1595, %v1593, %v1679
    %v1683 = vsel %vm1595, 0, %v1681
    %v1684 = vcosq.f32.pop %v1682
    %v1685 = vsinq.f32.pop %v1682
    %vm1686 = vweird.f32 %v1593
    %v1687 = vadd.s32 %v1683, 3
    %v1688 = vand.u32 %v1687, 3
    %vm1689 = vcmp.lt.s32.totalorder %v1688, 2
    %vm1690 = vcmp.eq.s32.totalorder %v1688, 0
    %v1691 = vxor.u32 %v1685, 2147483648
    %v1692 = vsel %vm1690, %v1684, %v1691
    %vm1693 = vcmp.eq.s32.totalorder %v1688, 2
    %v1694 = vxor.u32 %v1684, 2147483648
    %v1695 = vsel %vm1693, %v1694, %v1685
    %v1696 = vsel %vm1689, %v1692, %v1695
    %v1697 = vsel %vm1686, nan, %v1696
    %v1699 = vcombine.high %v1697, %v1697
    %v1700 = vrot.slane %v1697, 3
    %v1701 = vrot.slane %v1699, 3
    %1704 = vst [vmem:[#allocation5 + $0x50] sm:$0xe0] %v1700
    %1705 = vst [vmem:[#allocation5 + $0x58] sm:$0xe0] %v1701
    %v1706 = vand.u32 2147483647, %v1593
    %vm1707 = vcmp.le.f32.partialorder %v1706, 0.7853982
    %vm1708 = vcmp.lt.s32.totalorder %v1593, 0
    %v1709 = vand.u32 %v1593, 2139095040
    %v1710 = vshrl.u32 %v1709, 23
    %v1711 = vsub.s32 %v1710, 127
    %v1712 = vand.u32 2147483647, %v1593
    %v1713 = vand.u32 %v1712, 8388607
    %v1714 = vor.u32 %v1713, 8388608
    %v1715 = vsub.s32 0, %v1714
    %v1716 = vadd.s32 %v1711, 1
    %vm1717 = vcmp.gt.s32.totalorder %v1716, 0
    %v1718 = vsel %vm1717, %v1716, 0
    %v1719 = vshrl.u32 %v1718, 5
    %v1720 = vand.u32 %v1718, 31
    %v1721 = vsub.s32 32, %v1720
    %v1722 = vshrl.u32 683565275, %v1721
    %v1723 = vshll.u32 683565275, %v1720
    %v1724 = vshrl.u32 2475754826, %v1721
    %v1725 = vor.u32 %v1723, %v1724
    %v1726 = vshll.u32 2475754826, %v1720
    %v1727 = vshrl.u32 2131351028, %v1721
    %v1728 = vor.u32 %v1726, %v1727
    %v1729 = vshll.u32 2131351028, %v1720
    %v1730 = vshrl.u32 2102212464, %v1721
    %v1731 = vor.u32 %v1729, %v1730
    %v1732 = vshll.u32 2102212464, %v1720
    %v1733 = vshrl.u32 920167782, %v1721
    %v1734 = vor.u32 %v1732, %v1733
    %v1735 = vshll.u32 920167782, %v1720
    %v1736 = vshrl.u32 1326507024, %v1721
    %v1737 = vor.u32 %v1735, %v1736
    %vm1738 = vcmp.lt.s32.totalorder %v1719, 1
    %vm1739 = vcmp.lt.s32.totalorder %v1719, 2
    %vm1740 = vcmp.lt.s32.totalorder %v1719, 3
    %vm1741 = vcmp.lt.s32.totalorder %v1719, 4
    %v1742 = vsel %vm1738, %v1722, %v1725
    %v1743 = vsel %vm1741, %v1731, 2102212464
    %v1744 = vsel %vm1740, %v1728, %v1743
    %v1745 = vsel %vm1739, %v1742, %v1744
    %v1746 = vsel %vm1738, %v1725, %v1728
    %v1747 = vsel %vm1741, %v1734, 920167782
    %v1748 = vsel %vm1740, %v1731, %v1747
    %v1749 = vsel %vm1739, %v1746, %v1748
    %v1750 = vsel %vm1738, %v1728, %v1731
    %v1751 = vsel %vm1741, %v1737, 1326507024
    %v1752 = vsel %vm1740, %v1734, %v1751
    %v1753 = vsel %vm1739, %v1750, %v1752
    %v1754 = vshll.u32 %v1714, 8
    %v1755 = vmul.u32.u64.compose %v1754, %v1753
    %v1756 = vextract.low.u32 %v1755
    %v1757 = vextract.high.u32 %v1755
    %v1758 = vmul.u32.u64.compose %v1754, %v1749
    %v1759 = vextract.low.u32 %v1758
    %v1760 = vextract.high.u32 %v1758
    %v1761 = vmul.u32 %v1754, %v1745
    %v1762 = vadd.s32 %v1757, %v1759
    %vm1763 = vc.u32 %v1757, %v1759
    %v1764 = vadd.s32 %v1760, 1
    %v1765 = vsel %vm1763, %v1764, %v1760
    %v1766 = vadd.s32 %v1761, %v1765
    %v1767 = vadd.s32 %v1766, 536870912
    %v1768 = vshrl.u32 %v1767, 30
    %v1769 = vshll.u32 %v1768, 30
    %v1770 = vsub.s32 %v1766, %v1769
    %vm1771 = vcmp.lt.s32.totalorder %v1770, 0
    %v1772 = vsub.s32 0, %v1770
    %v1773 = vsel %vm1771, %v1772, %v1770
    %v1774 = vclz %v1773
    %v1775 = vsub.s32 %v1774, 2
    %vm1776 = vcmp.gt.s32.totalorder 0, %v1775
    %v1777 = vsel %vm1776, 0, %v1775
    %v1778 = vsub.s32 32, %v1777
    %v1779 = vshll.u32 %v1770, %v1777
    %v1780 = vshrl.u32 %v1762, %v1778
    %v1781 = vor.u32 %v1779, %v1780
    %v1782 = vsub.s32 4294967266, %v1777
    %v1783 = vadd.s32 %v1782, 127
    %v1784 = vshll.u32 %v1783, 23
    %v1785 = vor.u32 4788187, %v1784
    %v1786 = vand.u32 2147483647, %v1785
    %v1788 = vcvt.s32.f32 %v1781
    %v1789 = vmul.f32 %v1788, %v1786
    %v1790 = vxor.u32 %v1789, 2147483648
    %v1791 = vsel %vm1708, %v1790, %v1789
    %v1792 = vsub.s32 4, %v1768
    %v1793 = vsel %vm1708, %v1792, %v1768
    %v1794 = vsel %vm1707, %v1593, %v1791
    %v1795 = vsel %vm1707, 0, %v1793
    %v1796 = vcosq.f32.pop %v1794
    %v1797 = vsinq.f32.pop %v1794
    %vm1798 = vweird.f32 %v1593
    %v1799 = vand.u32 %v1795, 3
    %vm1800 = vcmp.lt.s32.totalorder %v1799, 2
    %vm1801 = vcmp.eq.s32.totalorder %v1799, 0
    %v1802 = vxor.u32 %v1797, 2147483648
    %v1803 = vsel %vm1801, %v1796, %v1802
    %vm1804 = vcmp.eq.s32.totalorder %v1799, 2
    %v1805 = vxor.u32 %v1796, 2147483648
    %v1806 = vsel %vm1804, %v1805, %v1797
    %v1807 = vsel %vm1800, %v1803, %v1806
    %v1808 = vsel %vm1798, nan, %v1807
    %v1810 = vcombine.high %v1808, %v1808
    %1812 = vst [vmem:[#allocation5 + $0x60] sm:$0x7] %v1808
    %1813 = vst [vmem:[#allocation5 + $0x68] sm:$0x7] %v1810
    %v1814 = vmul.f32 %v21, 455.22223
    %v1815 = vand.u32 2147483647, %v1814
    %vm1816 = vcmp.le.f32.partialorder %v1815, 0.7853982
    %vm1817 = vcmp.lt.s32.totalorder %v1814, 0
    %v1818 = vand.u32 %v1814, 2139095040
    %v1819 = vshrl.u32 %v1818, 23
    %v1820 = vsub.s32 %v1819, 127
    %v1821 = vand.u32 2147483647, %v1814
    %v1822 = vand.u32 %v1821, 8388607
    %v1823 = vor.u32 %v1822, 8388608
    %v1824 = vsub.s32 0, %v1823
    %v1825 = vadd.s32 %v1820, 1
    %vm1826 = vcmp.gt.s32.totalorder %v1825, 0
    %v1827 = vsel %vm1826, %v1825, 0
    %v1828 = vshrl.u32 %v1827, 5
    %v1829 = vand.u32 %v1827, 31
    %v1830 = vsub.s32 32, %v1829
    %v1831 = vshrl.u32 683565275, %v1830
    %v1832 = vshll.u32 683565275, %v1829
    %v1833 = vshrl.u32 2475754826, %v1830
    %v1834 = vor.u32 %v1832, %v1833
    %v1835 = vshll.u32 2475754826, %v1829
    %v1836 = vshrl.u32 2131351028, %v1830
    %v1837 = vor.u32 %v1835, %v1836
    %v1838 = vshll.u32 2131351028, %v1829
    %v1839 = vshrl.u32 2102212464, %v1830
    %v1840 = vor.u32 %v1838, %v1839
    %v1841 = vshll.u32 2102212464, %v1829
    %v1842 = vshrl.u32 920167782, %v1830
    %v1843 = vor.u32 %v1841, %v1842
    %v1844 = vshll.u32 920167782, %v1829
    %v1845 = vshrl.u32 1326507024, %v1830
    %v1846 = vor.u32 %v1844, %v1845
    %vm1847 = vcmp.lt.s32.totalorder %v1828, 1
    %vm1848 = vcmp.lt.s32.totalorder %v1828, 2
    %vm1849 = vcmp.lt.s32.totalorder %v1828, 3
    %vm1850 = vcmp.lt.s32.totalorder %v1828, 4
    %v1851 = vsel %vm1847, %v1831, %v1834
    %v1852 = vsel %vm1850, %v1840, 2102212464
    %v1853 = vsel %vm1849, %v1837, %v1852
    %v1854 = vsel %vm1848, %v1851, %v1853
    %v1855 = vsel %vm1847, %v1834, %v1837
    %v1856 = vsel %vm1850, %v1843, 920167782
    %v1857 = vsel %vm1849, %v1840, %v1856
    %v1858 = vsel %vm1848, %v1855, %v1857
    %v1859 = vsel %vm1847, %v1837, %v1840
    %v1860 = vsel %vm1850, %v1846, 1326507024
    %v1861 = vsel %vm1849, %v1843, %v1860
    %v1862 = vsel %vm1848, %v1859, %v1861
    %v1863 = vshll.u32 %v1823, 8
    %v1864 = vmul.u32.u64.compose %v1863, %v1862
    %v1865 = vextract.low.u32 %v1864
    %v1866 = vextract.high.u32 %v1864
    %v1867 = vmul.u32.u64.compose %v1863, %v1858
    %v1868 = vextract.low.u32 %v1867
    %v1869 = vextract.high.u32 %v1867
    %v1870 = vmul.u32 %v1863, %v1854
    %v1871 = vadd.s32 %v1866, %v1868
    %vm1872 = vc.u32 %v1866, %v1868
    %v1873 = vadd.s32 %v1869, 1
    %v1874 = vsel %vm1872, %v1873, %v1869
    %v1875 = vadd.s32 %v1870, %v1874
    %v1876 = vadd.s32 %v1875, 536870912
    %v1877 = vshrl.u32 %v1876, 30
    %v1878 = vshll.u32 %v1877, 30
    %v1879 = vsub.s32 %v1875, %v1878
    %vm1880 = vcmp.lt.s32.totalorder %v1879, 0
    %v1881 = vsub.s32 0, %v1879
    %v1882 = vsel %vm1880, %v1881, %v1879
    %v1883 = vclz %v1882
    %v1884 = vsub.s32 %v1883, 2
    %vm1885 = vcmp.gt.s32.totalorder 0, %v1884
    %v1886 = vsel %vm1885, 0, %v1884
    %v1887 = vsub.s32 32, %v1886
    %v1888 = vshll.u32 %v1879, %v1886
    %v1889 = vshrl.u32 %v1871, %v1887
    %v1890 = vor.u32 %v1888, %v1889
    %v1891 = vsub.s32 4294967266, %v1886
    %v1892 = vadd.s32 %v1891, 127
    %v1893 = vshll.u32 %v1892, 23
    %v1894 = vor.u32 4788187, %v1893
    %v1895 = vand.u32 2147483647, %v1894
    %v1897 = vcvt.s32.f32 %v1890
    %v1898 = vmul.f32 %v1897, %v1895
    %v1899 = vxor.u32 %v1898, 2147483648
    %v1900 = vsel %vm1817, %v1899, %v1898
    %v1901 = vsub.s32 4, %v1877
    %v1902 = vsel %vm1817, %v1901, %v1877
    %v1903 = vsel %vm1816, %v1814, %v1900
    %v1904 = vsel %vm1816, 0, %v1902
    %v1905 = vcosq.f32.pop %v1903
    %v1906 = vsinq.f32.pop %v1903
    %vm1907 = vweird.f32 %v1814
    %v1908 = vadd.s32 %v1904, 3
    %v1909 = vand.u32 %v1908, 3
    %vm1910 = vcmp.lt.s32.totalorder %v1909, 2
    %vm1911 = vcmp.eq.s32.totalorder %v1909, 0
    %v1912 = vxor.u32 %v1906, 2147483648
    %v1913 = vsel %vm1911, %v1905, %v1912
    %vm1914 = vcmp.eq.s32.totalorder %v1909, 2
    %v1915 = vxor.u32 %v1905, 2147483648
    %v1916 = vsel %vm1914, %v1915, %v1906
    %v1917 = vsel %vm1910, %v1913, %v1916
    %v1918 = vsel %vm1907, nan, %v1917
    %v1920 = vcombine.high %v1918, %v1918
    %v1921 = vrot.slane %v1918, 5
    %v1922 = vrot.slane %v1920, 5
    %1925 = vst [vmem:[#allocation5 + $0x60] sm:$0x38] %v1921
    %1926 = vst [vmem:[#allocation5 + $0x68] sm:$0x38] %v1922
    %v1927 = vand.u32 2147483647, %v1814
    %vm1928 = vcmp.le.f32.partialorder %v1927, 0.7853982
    %vm1929 = vcmp.lt.s32.totalorder %v1814, 0
    %v1930 = vand.u32 %v1814, 2139095040
    %v1931 = vshrl.u32 %v1930, 23
    %v1932 = vsub.s32 %v1931, 127
    %v1933 = vand.u32 2147483647, %v1814
    %v1934 = vand.u32 %v1933, 8388607
    %v1935 = vor.u32 %v1934, 8388608
    %v1936 = vsub.s32 0, %v1935
    %v1937 = vadd.s32 %v1932, 1
    %vm1938 = vcmp.gt.s32.totalorder %v1937, 0
    %v1939 = vsel %vm1938, %v1937, 0
    %v1940 = vshrl.u32 %v1939, 5
    %v1941 = vand.u32 %v1939, 31
    %v1942 = vsub.s32 32, %v1941
    %v1943 = vshrl.u32 683565275, %v1942
    %v1944 = vshll.u32 683565275, %v1941
    %v1945 = vshrl.u32 2475754826, %v1942
    %v1946 = vor.u32 %v1944, %v1945
    %v1947 = vshll.u32 2475754826, %v1941
    %v1948 = vshrl.u32 2131351028, %v1942
    %v1949 = vor.u32 %v1947, %v1948
    %v1950 = vshll.u32 2131351028, %v1941
    %v1951 = vshrl.u32 2102212464, %v1942
    %v1952 = vor.u32 %v1950, %v1951
    %v1953 = vshll.u32 2102212464, %v1941
    %v1954 = vshrl.u32 920167782, %v1942
    %v1955 = vor.u32 %v1953, %v1954
    %v1956 = vshll.u32 920167782, %v1941
    %v1957 = vshrl.u32 1326507024, %v1942
    %v1958 = vor.u32 %v1956, %v1957
    %vm1959 = vcmp.lt.s32.totalorder %v1940, 1
    %vm1960 = vcmp.lt.s32.totalorder %v1940, 2
    %vm1961 = vcmp.lt.s32.totalorder %v1940, 3
    %vm1962 = vcmp.lt.s32.totalorder %v1940, 4
    %v1963 = vsel %vm1959, %v1943, %v1946
    %v1964 = vsel %vm1962, %v1952, 2102212464
    %v1965 = vsel %vm1961, %v1949, %v1964
    %v1966 = vsel %vm1960, %v1963, %v1965
    %v1967 = vsel %vm1959, %v1946, %v1949
    %v1968 = vsel %vm1962, %v1955, 920167782
    %v1969 = vsel %vm1961, %v1952, %v1968
    %v1970 = vsel %vm1960, %v1967, %v1969
    %v1971 = vsel %vm1959, %v1949, %v1952
    %v1972 = vsel %vm1962, %v1958, 1326507024
    %v1973 = vsel %vm1961, %v1955, %v1972
    %v1974 = vsel %vm1960, %v1971, %v1973
    %v1975 = vshll.u32 %v1935, 8
    %v1976 = vmul.u32.u64.compose %v1975, %v1974
    %v1977 = vextract.low.u32 %v1976
    %v1978 = vextract.high.u32 %v1976
    %v1979 = vmul.u32.u64.compose %v1975, %v1970
    %v1980 = vextract.low.u32 %v1979
    %v1981 = vextract.high.u32 %v1979
    %v1982 = vmul.u32 %v1975, %v1966
    %v1983 = vadd.s32 %v1978, %v1980
    %vm1984 = vc.u32 %v1978, %v1980
    %v1985 = vadd.s32 %v1981, 1
    %v1986 = vsel %vm1984, %v1985, %v1981
    %v1987 = vadd.s32 %v1982, %v1986
    %v1988 = vadd.s32 %v1987, 536870912
    %v1989 = vshrl.u32 %v1988, 30
    %v1990 = vshll.u32 %v1989, 30
    %v1991 = vsub.s32 %v1987, %v1990
    %vm1992 = vcmp.lt.s32.totalorder %v1991, 0
    %v1993 = vsub.s32 0, %v1991
    %v1994 = vsel %vm1992, %v1993, %v1991
    %v1995 = vclz %v1994
    %v1996 = vsub.s32 %v1995, 2
    %vm1997 = vcmp.gt.s32.totalorder 0, %v1996
    %v1998 = vsel %vm1997, 0, %v1996
    %v1999 = vsub.s32 32, %v1998
    %v2000 = vshll.u32 %v1991, %v1998
    %v2001 = vshrl.u32 %v1983, %v1999
    %v2002 = vor.u32 %v2000, %v2001
    %v2003 = vsub.s32 4294967266, %v1998
    %v2004 = vadd.s32 %v2003, 127
    %v2005 = vshll.u32 %v2004, 23
    %v2006 = vor.u32 4788187, %v2005
    %v2007 = vand.u32 2147483647, %v2006
    %v2009 = vcvt.s32.f32 %v2002
    %v2010 = vmul.f32 %v2009, %v2007
    %v2011 = vxor.u32 %v2010, 2147483648
    %v2012 = vsel %vm1929, %v2011, %v2010
    %v2013 = vsub.s32 4, %v1989
    %v2014 = vsel %vm1929, %v2013, %v1989
    %v2015 = vsel %vm1928, %v1814, %v2012
    %v2016 = vsel %vm1928, 0, %v2014
    %v2017 = vcosq.f32.pop %v2015
    %v2018 = vsinq.f32.pop %v2015
    %vm2019 = vweird.f32 %v1814
    %v2020 = vand.u32 %v2016, 3
    %vm2021 = vcmp.lt.s32.totalorder %v2020, 2
    %vm2022 = vcmp.eq.s32.totalorder %v2020, 0
    %v2023 = vxor.u32 %v2018, 2147483648
    %v2024 = vsel %vm2022, %v2017, %v2023
    %vm2025 = vcmp.eq.s32.totalorder %v2020, 2
    %v2026 = vxor.u32 %v2017, 2147483648
    %v2027 = vsel %vm2025, %v2026, %v2018
    %v2028 = vsel %vm2021, %v2024, %v2027
    %v2029 = vsel %vm2019, nan, %v2028
    %v2031 = vcombine.high %v2029, %v2029
    %v2032 = vrot.slane %v2029, 2
    %v2033 = vrot.slane %v2031, 2
    %2036 = vst [vmem:[#allocation5 + $0x60] sm:$0xc0] %v2032
    %2037 = vst [vmem:[#allocation5 + $0x68] sm:$0xc0] %v2033
    %2038 = vst [vmem:[#allocation5 + $0x70] sm:$0x1] %v2032
    %2039 = vst [vmem:[#allocation5 + $0x78] sm:$0x1] %v2033
    %v2040 = vmul.f32 %v21, 512.0
    %v2041 = vand.u32 2147483647, %v2040
    %vm2042 = vcmp.le.f32.partialorder %v2041, 0.7853982
    %vm2043 = vcmp.lt.s32.totalorder %v2040, 0
    %v2044 = vand.u32 %v2040, 2139095040
    %v2045 = vshrl.u32 %v2044, 23
    %v2046 = vsub.s32 %v2045, 127
    %v2047 = vand.u32 2147483647, %v2040
    %v2048 = vand.u32 %v2047, 8388607
    %v2049 = vor.u32 %v2048, 8388608
    %v2050 = vsub.s32 0, %v2049
    %v2051 = vadd.s32 %v2046, 1
    %vm2052 = vcmp.gt.s32.totalorder %v2051, 0
    %v2053 = vsel %vm2052, %v2051, 0
    %v2054 = vshrl.u32 %v2053, 5
    %v2055 = vand.u32 %v2053, 31
    %v2056 = vsub.s32 32, %v2055
    %v2057 = vshrl.u32 683565275, %v2056
    %v2058 = vshll.u32 683565275, %v2055
    %v2059 = vshrl.u32 2475754826, %v2056
    %v2060 = vor.u32 %v2058, %v2059
    %v2061 = vshll.u32 2475754826, %v2055
    %v2062 = vshrl.u32 2131351028, %v2056
    %v2063 = vor.u32 %v2061, %v2062
    %v2064 = vshll.u32 2131351028, %v2055
    %v2065 = vshrl.u32 2102212464, %v2056
    %v2066 = vor.u32 %v2064, %v2065
    %v2067 = vshll.u32 2102212464, %v2055
    %v2068 = vshrl.u32 920167782, %v2056
    %v2069 = vor.u32 %v2067, %v2068
    %v2070 = vshll.u32 920167782, %v2055
    %v2071 = vshrl.u32 1326507024, %v2056
    %v2072 = vor.u32 %v2070, %v2071
    %vm2073 = vcmp.lt.s32.totalorder %v2054, 1
    %vm2074 = vcmp.lt.s32.totalorder %v2054, 2
    %vm2075 = vcmp.lt.s32.totalorder %v2054, 3
    %vm2076 = vcmp.lt.s32.totalorder %v2054, 4
    %v2077 = vsel %vm2073, %v2057, %v2060
    %v2078 = vsel %vm2076, %v2066, 2102212464
    %v2079 = vsel %vm2075, %v2063, %v2078
    %v2080 = vsel %vm2074, %v2077, %v2079
    %v2081 = vsel %vm2073, %v2060, %v2063
    %v2082 = vsel %vm2076, %v2069, 920167782
    %v2083 = vsel %vm2075, %v2066, %v2082
    %v2084 = vsel %vm2074, %v2081, %v2083
    %v2085 = vsel %vm2073, %v2063, %v2066
    %v2086 = vsel %vm2076, %v2072, 1326507024
    %v2087 = vsel %vm2075, %v2069, %v2086
    %v2088 = vsel %vm2074, %v2085, %v2087
    %v2089 = vshll.u32 %v2049, 8
    %v2090 = vmul.u32.u64.compose %v2089, %v2088
    %v2091 = vextract.low.u32 %v2090
    %v2092 = vextract.high.u32 %v2090
    %v2093 = vmul.u32.u64.compose %v2089, %v2084
    %v2094 = vextract.low.u32 %v2093
    %v2095 = vextract.high.u32 %v2093
    %v2096 = vmul.u32 %v2089, %v2080
    %v2097 = vadd.s32 %v2092, %v2094
    %vm2098 = vc.u32 %v2092, %v2094
    %v2099 = vadd.s32 %v2095, 1
    %v2100 = vsel %vm2098, %v2099, %v2095
    %v2101 = vadd.s32 %v2096, %v2100
    %v2102 = vadd.s32 %v2101, 536870912
    %v2103 = vshrl.u32 %v2102, 30
    %v2104 = vshll.u32 %v2103, 30
    %v2105 = vsub.s32 %v2101, %v2104
    %vm2106 = vcmp.lt.s32.totalorder %v2105, 0
    %v2107 = vsub.s32 0, %v2105
    %v2108 = vsel %vm2106, %v2107, %v2105
    %v2109 = vclz %v2108
    %v2110 = vsub.s32 %v2109, 2
    %vm2111 = vcmp.gt.s32.totalorder 0, %v2110
    %v2112 = vsel %vm2111, 0, %v2110
    %v2113 = vsub.s32 32, %v2112
    %v2114 = vshll.u32 %v2105, %v2112
    %v2115 = vshrl.u32 %v2097, %v2113
    %v2116 = vor.u32 %v2114, %v2115
    %v2117 = vsub.s32 4294967266, %v2112
    %v2118 = vadd.s32 %v2117, 127
    %v2119 = vshll.u32 %v2118, 23
    %v2120 = vor.u32 4788187, %v2119
    %v2121 = vand.u32 2147483647, %v2120
    %v2123 = vcvt.s32.f32 %v2116
    %v2124 = vmul.f32 %v2123, %v2121
    %v2125 = vxor.u32 %v2124, 2147483648
    %v2126 = vsel %vm2043, %v2125, %v2124
    %v2127 = vsub.s32 4, %v2103
    %v2128 = vsel %vm2043, %v2127, %v2103
    %v2129 = vsel %vm2042, %v2040, %v2126
    %v2130 = vsel %vm2042, 0, %v2128
    %v2131 = vcosq.f32.pop %v2129
    %v2132 = vsinq.f32.pop %v2129
    %vm2133 = vweird.f32 %v2040
    %v2134 = vadd.s32 %v2130, 3
    %v2135 = vand.u32 %v2134, 3
    %vm2136 = vcmp.lt.s32.totalorder %v2135, 2
    %vm2137 = vcmp.eq.s32.totalorder %v2135, 0
    %v2138 = vxor.u32 %v2132, 2147483648
    %v2139 = vsel %vm2137, %v2131, %v2138
    %vm2140 = vcmp.eq.s32.totalorder %v2135, 2
    %v2141 = vxor.u32 %v2131, 2147483648
    %v2142 = vsel %vm2140, %v2141, %v2132
    %v2143 = vsel %vm2136, %v2139, %v2142
    %v2144 = vsel %vm2133, nan, %v2143
    %v2146 = vcombine.high %v2144, %v2144
    %v2147 = vrot.slane %v2144, 7
    %v2148 = vrot.slane %v2146, 7
    %2151 = vst [vmem:[#allocation5 + $0x70] sm:$0xe] %v2147
    %2152 = vst [vmem:[#allocation5 + $0x78] sm:$0xe] %v2148
    %v2153 = vand.u32 2147483647, %v2040
    %vm2154 = vcmp.le.f32.partialorder %v2153, 0.7853982
    %vm2155 = vcmp.lt.s32.totalorder %v2040, 0
    %v2156 = vand.u32 %v2040, 2139095040
    %v2157 = vshrl.u32 %v2156, 23
    %v2158 = vsub.s32 %v2157, 127
    %v2159 = vand.u32 2147483647, %v2040
    %v2160 = vand.u32 %v2159, 8388607
    %v2161 = vor.u32 %v2160, 8388608
    %v2162 = vsub.s32 0, %v2161
    %v2163 = vadd.s32 %v2158, 1
    %vm2164 = vcmp.gt.s32.totalorder %v2163, 0
    %v2165 = vsel %vm2164, %v2163, 0
    %v2166 = vshrl.u32 %v2165, 5
    %v2167 = vand.u32 %v2165, 31
    %v2168 = vsub.s32 32, %v2167
    %v2169 = vshrl.u32 683565275, %v2168
    %v2170 = vshll.u32 683565275, %v2167
    %v2171 = vshrl.u32 2475754826, %v2168
    %v2172 = vor.u32 %v2170, %v2171
    %v2173 = vshll.u32 2475754826, %v2167
    %v2174 = vshrl.u32 2131351028, %v2168
    %v2175 = vor.u32 %v2173, %v2174
    %v2176 = vshll.u32 2131351028, %v2167
    %v2177 = vshrl.u32 2102212464, %v2168
    %v2178 = vor.u32 %v2176, %v2177
    %v2179 = vshll.u32 2102212464, %v2167
    %v2180 = vshrl.u32 920167782, %v2168
    %v2181 = vor.u32 %v2179, %v2180
    %v2182 = vshll.u32 920167782, %v2167
    %v2183 = vshrl.u32 1326507024, %v2168
    %v2184 = vor.u32 %v2182, %v2183
    %vm2185 = vcmp.lt.s32.totalorder %v2166, 1
    %vm2186 = vcmp.lt.s32.totalorder %v2166, 2
    %vm2187 = vcmp.lt.s32.totalorder %v2166, 3
    %vm2188 = vcmp.lt.s32.totalorder %v2166, 4
    %v2189 = vsel %vm2185, %v2169, %v2172
    %v2190 = vsel %vm2188, %v2178, 2102212464
    %v2191 = vsel %vm2187, %v2175, %v2190
    %v2192 = vsel %vm2186, %v2189, %v2191
    %v2193 = vsel %vm2185, %v2172, %v2175
    %v2194 = vsel %vm2188, %v2181, 920167782
    %v2195 = vsel %vm2187, %v2178, %v2194
    %v2196 = vsel %vm2186, %v2193, %v2195
    %v2197 = vsel %vm2185, %v2175, %v2178
    %v2198 = vsel %vm2188, %v2184, 1326507024
    %v2199 = vsel %vm2187, %v2181, %v2198
    %v2200 = vsel %vm2186, %v2197, %v2199
    %v2201 = vshll.u32 %v2161, 8
    %v2202 = vmul.u32.u64.compose %v2201, %v2200
    %v2203 = vextract.low.u32 %v2202
    %v2204 = vextract.high.u32 %v2202
    %v2205 = vmul.u32.u64.compose %v2201, %v2196
    %v2206 = vextract.low.u32 %v2205
    %v2207 = vextract.high.u32 %v2205
    %v2208 = vmul.u32 %v2201, %v2192
    %v2209 = vadd.s32 %v2204, %v2206
    %vm2210 = vc.u32 %v2204, %v2206
    %v2211 = vadd.s32 %v2207, 1
    %v2212 = vsel %vm2210, %v2211, %v2207
    %v2213 = vadd.s32 %v2208, %v2212
    %v2214 = vadd.s32 %v2213, 536870912
    %v2215 = vshrl.u32 %v2214, 30
    %v2216 = vshll.u32 %v2215, 30
    %v2217 = vsub.s32 %v2213, %v2216
    %vm2218 = vcmp.lt.s32.totalorder %v2217, 0
    %v2219 = vsub.s32 0, %v2217
    %v2220 = vsel %vm2218, %v2219, %v2217
    %v2221 = vclz %v2220
    %v2222 = vsub.s32 %v2221, 2
    %vm2223 = vcmp.gt.s32.totalorder 0, %v2222
    %v2224 = vsel %vm2223, 0, %v2222
    %v2225 = vsub.s32 32, %v2224
    %v2226 = vshll.u32 %v2217, %v2224
    %v2227 = vshrl.u32 %v2209, %v2225
    %v2228 = vor.u32 %v2226, %v2227
    %v2229 = vsub.s32 4294967266, %v2224
    %v2230 = vadd.s32 %v2229, 127
    %v2231 = vshll.u32 %v2230, 23
    %v2232 = vor.u32 4788187, %v2231
    %v2233 = vand.u32 2147483647, %v2232
    %v2235 = vcvt.s32.f32 %v2228
    %v2236 = vmul.f32 %v2235, %v2233
    %v2237 = vxor.u32 %v2236, 2147483648
    %v2238 = vsel %vm2155, %v2237, %v2236
    %v2239 = vsub.s32 4, %v2215
    %v2240 = vsel %vm2155, %v2239, %v2215
    %v2241 = vsel %vm2154, %v2040, %v2238
    %v2242 = vsel %vm2154, 0, %v2240
    %v2243 = vcosq.f32.pop %v2241
    %v2244 = vsinq.f32.pop %v2241
    %vm2245 = vweird.f32 %v2040
    %v2246 = vand.u32 %v2242, 3
    %vm2247 = vcmp.lt.s32.totalorder %v2246, 2
    %vm2248 = vcmp.eq.s32.totalorder %v2246, 0
    %v2249 = vxor.u32 %v2244, 2147483648
    %v2250 = vsel %vm2248, %v2243, %v2249
    %vm2251 = vcmp.eq.s32.totalorder %v2246, 2
    %v2252 = vxor.u32 %v2243, 2147483648
    %v2253 = vsel %vm2251, %v2252, %v2244
    %v2254 = vsel %vm2247, %v2250, %v2253
    %v2255 = vsel %vm2245, nan, %v2254
    %v2257 = vcombine.low %v2255, %v2255
    %2259 = vst [vmem:[#allocation5 + $0x70] sm:$0x70] %v2257
    %2260 = vst [vmem:[#allocation5 + $0x78] sm:$0x70] %v2255
    // Predicated region
    $region10: #{tpu_custom_call.1} parent=1 // pred_check
      _
    $region11: #{tpu_custom_call.1} parent=1 // pred_check_branch
      %2262 = sbr.rel (0) target = $region13
    $region12: #{tpu_custom_call.1} parent=1 // pred_region
      %s2264 = ssub.s32 2048, 2048
      %2265 = vsyncadd [#allocation4], %s2264
      %s2266 = sshll.u32 [#allocation5], 4
      %s2267 = int_to_ptr.vmem [resolvable:$true] %s2266
      %2272 = dma.vmem_to_hbm [thread:$0]  %s2267, 2048, %s1, [#allocation4], 256, 256, 16
    $region13: #{tpu_custom_call.1} parent=1 // pred_fallthru
      _
    // Predicated region
    $region14: #{tpu_custom_call.1} parent=1 // pred_check
      _
    $region15: #{tpu_custom_call.1} parent=1 // pred_check_branch
      %2274 = sbr.rel (0) target = $region17
    $region16: #{tpu_custom_call.1} parent=1 // pred_region
      %2275 = dma.done [#allocation4], 2048
    $region17: #{tpu_custom_call.1} parent=1 // pred_fallthru
      _
    %2276 = vsyncpa [#allocation3], 1
    %2277 = vsyncpa [#allocation4], 1

</llo_original>
